<compile_context>
chip_gen: v5e
topology: v5e:2x2
jax: 0.10.0
libtpu: 0.0.40
codegen_flags: <defaults>
</compile_context>

<pallas_src>
import math
from functools import partial

import jax
import jax.numpy as jnp
from jax.experimental import pallas as pl
from jax.experimental.pallas import tpu as pltpu

LN_EPS = 1e-5
# MXU input dtype (accumulation is always f32). Weights are stored in this
# dtype in HBM; set to jnp.float32 for bit-closer-to-torch matmuls.
MATMUL_DTYPE = jnp.bfloat16


def _round_up(x, m):
    return ((x + m - 1) // m) * m


def _default_vmem_limit():
    # ~96 MiB on v5e/v6e (128 MiB physical), ~48 MiB on v7x (64 MiB physical).
    try:
        cap = int(pltpu.get_tpu_info().vmem_capacity_bytes)
    except Exception:
        cap = 64 * 1024 * 1024
    return min(cap * 3 // 4, 96 * 1024 * 1024)


VMEM_LIMIT = _default_vmem_limit()


# ------------- fused LayerNorm -> GEMM(s) -> bias [-> ReLU] [-> +residual] ---

def _ln_matmul_kernel(*refs, n_out, apply_relu, has_residual):
    # refs: x, gamma, beta, w_0..w_{n-1}, bias_0..bias_{n-1}, [res], o_0..o_{n-1}
    x_ref, g_ref, b_ref = refs[0], refs[1], refs[2]
    w_refs = refs[3:3 + n_out]
    bias_refs = refs[3 + n_out:3 + 2 * n_out]
    pos = 3 + 2 * n_out
    res_ref = refs[pos] if has_residual else None
    o_refs = refs[pos + (1 if has_residual else 0):]

    x = x_ref[...].astype(jnp.float32)
    mean = jnp.mean(x, axis=-1, keepdims=True)
    var = jnp.mean(jnp.square(x - mean), axis=-1, keepdims=True)
    xn = (x - mean) * jax.lax.rsqrt(var + LN_EPS)
    xn = (xn * g_ref[...] + b_ref[...]).astype(MATMUL_DTYPE)       # (TM, K)

    for w_ref, bias_ref, o_ref in zip(w_refs, bias_refs, o_refs):
        y = jnp.dot(xn, w_ref[...], preferred_element_type=jnp.float32)
        y = y + bias_ref[...]
        if apply_relu:
            y = jnp.maximum(y, 0.0)
        if has_residual:
            y = y + res_ref[...].astype(jnp.float32)               # residual f32
        o_ref[...] = y.astype(o_ref.dtype)


def _ln_matmul(x2d, gamma, beta, ws, biases, residual=None, apply_relu=False,
               out_dtype=jnp.float32, tile_m=512, tile_n=256):
    """LayerNorm(x2d) @ w_i + bias_i [+ ReLU] [+ residual] for each weight.

    Row-tiled on M and column-tiled on N (lane-dense outputs).  Weights are
    expected in bf16 (MATMUL_DTYPE); LN, bias add and residual stay f32.
    """
    # TODO(synk): K-tiling would need a two-pass LN (mean/var over full K);
    #             at d_model/dim_ff <= 8192 the (TM, K) x-block fits VMEM.
    M, K = x2d.shape
    n_out = len(ws)
    N = ws[0].shape[1]
    assert all(w.shape == (K, N) for w in ws)
    assert residual is None or n_out == 1

    # Tile selection: TM multiple of 8, TN multiple of 128 (lane-dense stores).
    if M <= tile_m:
        TM = _round_up(M, 8); Mp = TM
    else:
        TM = tile_m; Mp = _round_up(M, TM)
    if N <= tile_n:
        TN = _round_up(N, 128); Np = TN
    else:
        TN = tile_n; Np = _round_up(N, TN)

    # TODO(synk): replace tail padding with masked stores (pl.when + pltpu.store).
    if Mp != M:
        x2d = jnp.pad(x2d, ((0, Mp - M), (0, 0)))
    ws_p, biases_p = [], []
    for w, bias in zip(ws, biases):
        if Np != N:
            w = jnp.pad(w, ((0, 0), (0, Np - N)))
            bias = jnp.pad(bias, (0, Np - N))
        ws_p.append(w)
        biases_p.append(bias.reshape(1, Np))
    res = residual
    if res is not None and (Mp != M or Np != N):
        res = jnp.pad(res, ((0, Mp - M), (0, Np - N)))

    num_m, num_n = Mp // TM, Np // TN

    # TODO(synk): single-buffer grid-invariant inputs via pipeline_mode=pl.Buffered(1).
    in_specs = [
        pl.BlockSpec((TM, K), lambda j, i: (i, 0)),
        pl.BlockSpec((1, K), lambda j, i: (0, 0)),
        pl.BlockSpec((1, K), lambda j, i: (0, 0)),
    ]
    args = [x2d, gamma.reshape(1, K), beta.reshape(1, K)]
    for w in ws_p:
        in_specs.append(pl.BlockSpec((K, TN), lambda j, i: (0, j)))
        args.append(w)
    for bias in biases_p:
        in_specs.append(pl.BlockSpec((1, TN), lambda j, i: (0, j)))
        args.append(bias)
    if res is not None:
        in_specs.append(pl.BlockSpec((TM, TN), lambda j, i: (i, j)))
        args.append(res)

    out_shape = tuple(jax.ShapeDtypeStruct((Mp, Np), out_dtype)
                      for _ in range(n_out))
    out_specs = [pl.BlockSpec((TM, TN), lambda j, i: (i, j))
                 for _ in range(n_out)]

    outs = pl.pallas_call(
        partial(_ln_matmul_kernel, n_out=n_out, apply_relu=apply_relu,
                has_residual=res is not None),
        out_shape=out_shape,
        grid=(num_n, num_m),          # N tiles outer -> weight block changes rarely
        in_specs=in_specs,
        out_specs=out_specs,
        compiler_params=pltpu.CompilerParams(
            dimension_semantics=("parallel", "parallel"),
            vmem_limit_bytes=VMEM_LIMIT),
    )(*args)

    outs = tuple(outs)
    if Mp != M or Np != N:
        outs = tuple(o[:M, :N] for o in outs)
    return outs


def ln_linear(x2d, gamma, beta, w, bias, residual=None, apply_relu=False,
              out_dtype=jnp.float32):
    return _ln_matmul(x2d, gamma, beta, [w], [bias], residual=residual,
                      apply_relu=apply_relu, out_dtype=out_dtype)[0]


# ----------------------- grouped (dilated) SDPA kernel ----------------------

def _grouped_sdpa_kernel(q_ref, k_ref, v_ref, o_ref, *, g, scale):
    # Blocks are (g, d, TR): rows R on lanes (lane-dense), head_dim on sublanes.
    # softmax is over the group-head axis g (reference semantics: L = S = g).
    # TODO(synk): for large g (>= ~16) switch to an MXU-tiled score matmul.
    q = q_ref[...].astype(jnp.float32)
    k = k_ref[...].astype(jnp.float32)
    v = v_ref[...].astype(jnp.float32)
    for qi in range(g):
        # scores against every key head: each is (1, TR) via a sublane reduce.
        s_list = [jnp.sum(q[qi] * k[ki], axis=0, keepdims=True) * scale
                  for ki in range(g)]
        m = s_list[0]
        for t in s_list[1:]:
            m = jnp.maximum(m, t)
        p_list = [jnp.exp(t - m) for t in s_list]
        denom = p_list[0]
        for t in p_list[1:]:
            denom = denom + t
        inv = pl.reciprocal(denom, approx=True)
        o = (p_list[0] * inv) * v[0]
        for ki in range(1, g):
            o = o + (p_list[ki] * inv) * v[ki]
        o_ref[qi] = o.astype(o_ref.dtype)


def sdpa_grouped(qg, kg, vg, max_tile_r=4096):
    """qg/kg/vg: (g, d, R).  Per-row attention over the g group heads."""
    g, d, R = qg.shape
    scale = 1.0 / math.sqrt(d)

    # Pick TR (multiple of 128) from a ~16 MiB working-set budget.
    budget = 16 * 1024 * 1024
    per_r = g * d * 20            # 3 bf16 inputs + f32 output, double buffered
    tr_cap = max(128, min(max_tile_r, (budget // per_r) // 128 * 128))
    if R <= tr_cap:
        TR = R; Rp = R
    else:
        TR = tr_cap; Rp = _round_up(R, TR)
    if Rp != R:
        pad = ((0, 0), (0, 0), (0, Rp - R))
        qg, kg, vg = jnp.pad(qg, pad), jnp.pad(kg, pad), jnp.pad(vg, pad)

    out = pl.pallas_call(
        partial(_grouped_sdpa_kernel, g=g, scale=scale),
        out_shape=jax.ShapeDtypeStruct((g, d, Rp), jnp.float32),
        grid=(Rp // TR,),
        in_specs=[pl.BlockSpec((g, d, TR), lambda i: (0, 0, i))] * 3,
        out_specs=pl.BlockSpec((g, d, TR), lambda i: (0, 0, i)),
        compiler_params=pltpu.CompilerParams(
            dimension_semantics=("parallel",),
            vmem_limit_bytes=VMEM_LIMIT),
    )(qg, kg, vg)
    return out[..., :R] if Rp != R else out


# ------------------------- DilatedAttention (glue) ---------------------------

def dilated_attention(q, k, v, segment_lengths, dilation_rates):
    """q, k, v: (b, n, h, d).  Faithful to the reference DilatedAttention
    (SDPA softmax over the group-head axis; per-group sum normalization).
    """
    # TODO(synk): fuse gather / normalization / scatter into the Pallas kernel
    #             via PrefetchScalarGridSpec (scalar-prefetched offsets).
    b, n, h, d = q.shape
    num_groups = len(dilation_rates)
    group_sizes = [h // num_groups] * num_groups
    for i in range(h % num_groups):
        group_sizes[i] += 1
    offs = [0]
    for gsz in group_sizes:
        offs.append(offs[-1] + gsz)            # cumulative head offsets (bug fix)
    inv_groups = 1.0 / num_groups

    slabs = []
    for i, (g, r, s) in enumerate(zip(group_sizes, dilation_rates,
                                      segment_lengths)):
        n_seg = n // s
        offset = i % r
        hmin, hmax = offs[i], offs[i + 1]

        qs = q.reshape(b, n_seg, s, h, d)
        ks = k.reshape(b, n_seg, s, h, d)
        vs = v.reshape(b, n_seg, s, h, d)

        if s % r == 0:
            sp = s // r
            # (offset::r) as a static index of the (sp, r) view -> no gather.
            qg = qs.reshape(b, n_seg, sp, r, h, d)[:, :, :, offset, hmin:hmax, :]
            kg = ks.reshape(b, n_seg, sp, r, h, d)[:, :, :, offset, hmin:hmax, :]
            vg = vs.reshape(b, n_seg, sp, r, h, d)[:, :, :, offset, hmin:hmax, :]
        else:
            qg = qs[:, :, offset::r, hmin:hmax, :]
            kg = ks[:, :, offset::r, hmin:hmax, :]
            vg = vs[:, :, offset::r, hmin:hmax, :]
            sp = qg.shape[2]

        R = b * n_seg * sp

        def to_gdr(t):   # (b, n_seg, sp, g, d) -> lane-dense (g, d, R)
            return jnp.transpose(t, (3, 4, 0, 1, 2)).reshape(g, d, R)

        x = sdpa_grouped(to_gdr(qg), to_gdr(kg), to_gdr(vg))       # (g, d, R) f32

        # reference: x / x.sum(dim=(1,2), keepdim=True); final /num_groups folded in.
        xr = x.reshape(g, d, b, n_seg * sp)
        denom = jnp.sum(xr, axis=3, keepdims=True)
        xr = xr * (inv_groups / denom)

        xg = jnp.transpose(xr.reshape(g, d, b, n_seg, sp),
                           (2, 3, 4, 0, 1)).astype(jnp.bfloat16)   # (b,n_seg,sp,g,d)

        if sp == s:                                 # r == 1: covers every position
            slab = xg.reshape(b, n, g, d)
        elif s % r == 0:
            slab6 = jnp.zeros((b, n_seg, sp, r, g, d), xg.dtype)
            slab6 = slab6.at[:, :, :, offset].set(xg)              # static index
            slab = slab6.reshape(b, n, g, d)
        else:
            slab5 = jnp.zeros((b, n_seg, s, g, d), xg.dtype)
            slab5 = slab5.at[:, :, offset::r].set(xg)
            slab = slab5.reshape(b, n, g, d)
        slabs.append(slab)

    # Groups partition the head axis exactly -> single concat, no full rewrites.
    return jnp.concatenate(slabs, axis=2)           # (b, n, h, d), /num_groups applied


# ----------------------- encoder layer forward (fused) -----------------------

def encoder_layer_forward(params, src, segment_lengths, dilation_rates, nhead):
    b, n, d_model = src.shape
    hd = d_model // nhead
    x2 = src.reshape(b * n, d_model)

    # --- self-attention block: norm1 -> Q/K/V (3 contiguous bf16 outputs)
    #     -> dilated attention -> mha_norm -> out_proj -> (+ residual);
    #     dropout = identity ---
    q, k, v = _ln_matmul(
        x2, params['norm1_g'], params['norm1_b'],
        [params['wq'], params['wk'], params['wv']],
        [params['bq'], params['bk'], params['bv']],
        out_dtype=jnp.bfloat16)
    a = dilated_attention(q.reshape(b, n, nhead, hd),
                          k.reshape(b, n, nhead, hd),
                          v.reshape(b, n, nhead, hd),
                          segment_lengths, dilation_rates)
    x2 = ln_linear(a.reshape(b * n, d_model),
                   params['mha_norm_g'], params['mha_norm_b'],
                   params['wo'], params['bo'],
                   residual=x2, out_dtype=jnp.float32)

    # --- feedforward block: norm2 -> linear1 -> ReLU -> norm3 -> linear2
    #     -> (+ residual); dropout = identity ---
    hid = ln_linear(x2, params['norm2_g'], params['norm2_b'],
                    params['w1'], params['b1'], apply_relu=True,
                    out_dtype=jnp.bfloat16)
    x2 = ln_linear(hid, params['norm3_g'], params['norm3_b'],
                   params['w2'], params['b2'],
                   residual=x2, out_dtype=jnp.float32)

    return x2.reshape(b, n, d_model)


# --------------------------------- parameters --------------------------------

def init_params(key, d_model, nhead, dim_ff, gamma_init=1.0):
    ks = jax.random.split(key, 6)

    def xavier_normal_t(k, out_f, in_f, gain=1.0):
        std = gain * math.sqrt(2.0 / (in_f + out_f))
        w = jax.random.normal(k, (out_f, in_f), jnp.float32) * std
        # stored as (in, out) so kernels compute x @ W; bf16 in HBM (cast once).
        return w.T.astype(MATMUL_DTYPE)

    p = {}
    p['wq'] = xavier_normal_t(ks[0], d_model, d_model)
    p['wk'] = xavier_normal_t(ks[1], d_model, d_model)
    p['wv'] = xavier_normal_t(ks[2], d_model, d_model, gamma_init)
    p['bq'] = jnp.zeros((d_model,), jnp.float32)
    p['bk'] = jnp.zeros((d_model,), jnp.float32)
    p['bv'] = jnp.zeros((d_model,), jnp.float32)
    p['wo'] = xavier_normal_t(ks[3], d_model, d_model, gamma_init)
    p['bo'] = jnp.zeros((d_model,), jnp.float32)
    p['w1'] = xavier_normal_t(ks[4], dim_ff, d_model, gamma_init)
    p['b1'] = jnp.zeros((dim_ff,), jnp.float32)
    p['w2'] = xavier_normal_t(ks[5], d_model, dim_ff, gamma_init)
    p['b2'] = jnp.zeros((d_model,), jnp.float32)
    for name, dim in [('norm1', d_model), ('norm2', d_model),
                      ('norm3', dim_ff), ('mha_norm', d_model)]:
        p[name + '_g'] = jnp.ones((dim,), jnp.float32)
        p[name + '_b'] = jnp.zeros((dim,), jnp.float32)
    return p


# ------------------------------------ main ------------------------------------

if __name__ == "__main__":
    key = jax.random.PRNGKey(0)
    kparam, kx = jax.random.split(key)

    # d_model=128, nhead=4 -> head_dim=32 (divisible by 8, <=128); all GEMM
    # output widths (128, 256) are lane-dense multiples of 128.
    b, n, d_model, nhead = 2, 8, 128, 4
    dim_ff = 256
    segment_lengths = (4, 8)     # both divide n = 8
    dilation_rates = (1, 2)

    params = init_params(kparam, d_model, nhead, dim_ff)
    src = jax.random.normal(kx, (b, n, d_model), jnp.float32)

    fwd = jax.jit(lambda p, x: encoder_layer_forward(
        p, x, segment_lengths, dilation_rates, nhead))
    out = jax.block_until_ready(fwd(params, src))

    assert out.shape == (b, n, d_model)
    assert bool(jnp.all(jnp.isfinite(out)))
    print("KERNEL_OK")
</pallas_src>

<mosaic_0001>
module attributes {stable_mosaic.version = 11 : i64} {
  func.func @_ln_matmul_kernel(%arg0: i32, %arg1: i32, %arg2: memref<16x128xf32, #tpu.memory_space<vmem>>, %arg3: memref<1x128xf32, #tpu.memory_space<vmem>>, %arg4: memref<1x128xf32, #tpu.memory_space<vmem>>, %arg5: memref<128x128xbf16, #tpu.memory_space<vmem>>, %arg6: memref<128x128xbf16, #tpu.memory_space<vmem>>, %arg7: memref<128x128xbf16, #tpu.memory_space<vmem>>, %arg8: memref<1x128xf32, #tpu.memory_space<vmem>>, %arg9: memref<1x128xf32, #tpu.memory_space<vmem>>, %arg10: memref<1x128xf32, #tpu.memory_space<vmem>>, %arg11: memref<16x128xbf16, #tpu.memory_space<vmem>>, %arg12: memref<16x128xbf16, #tpu.memory_space<vmem>>, %arg13: memref<16x128xbf16, #tpu.memory_space<vmem>>) attributes {dimension_semantics = [#tpu.dimension_semantics<parallel>, #tpu.dimension_semantics<parallel>], iteration_bounds = array<i64: 1, 1>, scalar_prefetch = 0 : i64, scratch_operands = 0 : i64, tpu.core_type = #tpu.core_type<tc>, window_params = [{transform_indices = @transform_0, window_bounds = array<i64: 16, 128>}, {pipeline_mode = #tpu.pipeline_mode<synchronous>, transform_indices = @transform_1, window_bounds = array<i64: 1, 128>}, {pipeline_mode = #tpu.pipeline_mode<synchronous>, transform_indices = @transform_2, window_bounds = array<i64: 1, 128>}, {transform_indices = @transform_3, window_bounds = array<i64: 128, 128>}, {transform_indices = @transform_4, window_bounds = array<i64: 128, 128>}, {transform_indices = @transform_5, window_bounds = array<i64: 128, 128>}, {transform_indices = @transform_6, window_bounds = array<i64: 1, 128>}, {transform_indices = @transform_7, window_bounds = array<i64: 1, 128>}, {transform_indices = @transform_8, window_bounds = array<i64: 1, 128>}, {transform_indices = @transform_9, window_bounds = array<i64: 16, 128>}, {transform_indices = @transform_10, window_bounds = array<i64: 16, 128>}, {transform_indices = @transform_11, window_bounds = array<i64: 16, 128>}]} {
    %c0 = arith.constant 0 : index
    %c0_0 = arith.constant 0 : index
    %0 = vector.load %arg2[%c0, %c0_0] : memref<16x128xf32, #tpu.memory_space<vmem>>, vector<16x128xf32>
    %cst = arith.constant dense<0.000000e+00> : vector<16xf32>
    %1 = vector.multi_reduction <add>, %0, %cst [1] : vector<16x128xf32> to vector<16xf32>
    %2 = vector.shape_cast %1 : vector<16xf32> to vector<16x1xf32>
    %cst_1 = arith.constant 1.280000e+02 : f32
    %3 = vector.broadcast %cst_1 : f32 to vector<16x1xf32>
    %4 = arith.divf %2, %3 : vector<16x1xf32>
    %5 = vector.broadcast %4 : vector<16x1xf32> to vector<16x128xf32>
    %6 = arith.subf %0, %5 : vector<16x128xf32>
    %7 = arith.mulf %6, %6 : vector<16x128xf32>
    %cst_2 = arith.constant dense<0.000000e+00> : vector<16xf32>
    %8 = vector.multi_reduction <add>, %7, %cst_2 [1] : vector<16x128xf32> to vector<16xf32>
    %9 = vector.shape_cast %8 : vector<16xf32> to vector<16x1xf32>
    %cst_3 = arith.constant 1.280000e+02 : f32
    %10 = vector.broadcast %cst_3 : f32 to vector<16x1xf32>
    %11 = arith.divf %9, %10 : vector<16x1xf32>
    %12 = vector.broadcast %4 : vector<16x1xf32> to vector<16x128xf32>
    %13 = arith.subf %0, %12 : vector<16x128xf32>
    %cst_4 = arith.constant 9.99999974E-6 : f32
    %14 = vector.broadcast %cst_4 : f32 to vector<16x1xf32>
    %15 = arith.addf %11, %14 : vector<16x1xf32>
    %16 = math.rsqrt %15 : vector<16x1xf32>
    %17 = vector.broadcast %16 : vector<16x1xf32> to vector<16x128xf32>
    %18 = arith.mulf %13, %17 : vector<16x128xf32>
    %c0_5 = arith.constant 0 : index
    %c0_6 = arith.constant 0 : index
    %19 = vector.load %arg3[%c0_5, %c0_6] : memref<1x128xf32, #tpu.memory_space<vmem>>, vector<1x128xf32>
    %20 = vector.broadcast %19 : vector<1x128xf32> to vector<16x128xf32>
    %21 = arith.mulf %18, %20 : vector<16x128xf32>
    %c0_7 = arith.constant 0 : index
    %c0_8 = arith.constant 0 : index
    %22 = vector.load %arg4[%c0_7, %c0_8] : memref<1x128xf32, #tpu.memory_space<vmem>>, vector<1x128xf32>
    %23 = vector.broadcast %22 : vector<1x128xf32> to vector<16x128xf32>
    %24 = arith.addf %21, %23 : vector<16x128xf32>
    %25 = arith.truncf %24 : vector<16x128xf32> to vector<16x128xbf16>
    %c0_9 = arith.constant 0 : index
    %c0_10 = arith.constant 0 : index
    %26 = vector.load %arg5[%c0_9, %c0_10] : memref<128x128xbf16, #tpu.memory_space<vmem>>, vector<128x128xbf16>
    %cst_11 = arith.constant dense<0.000000e+00> : vector<16x128xf32>
    %27 = tpu.matmul %25, %26, %cst_11 {dimension_numbers = #tpu.dot_dimension_numbers<[1], [0], [0], [1], [0, 0, 1, 1], [], []>} : vector<16x128xbf16>, vector<128x128xbf16>, vector<16x128xf32> -> vector<16x128xf32>
    %c0_12 = arith.constant 0 : index
    %c0_13 = arith.constant 0 : index
    %28 = vector.load %arg8[%c0_12, %c0_13] : memref<1x128xf32, #tpu.memory_space<vmem>>, vector<1x128xf32>
    %29 = vector.broadcast %28 : vector<1x128xf32> to vector<16x128xf32>
    %30 = arith.addf %27, %29 : vector<16x128xf32>
    %31 = arith.truncf %30 : vector<16x128xf32> to vector<16x128xbf16>
    %c0_14 = arith.constant 0 : index
    %c0_15 = arith.constant 0 : index
    %32 = vector.load %arg11[%c0_14, %c0_15] : memref<16x128xbf16, #tpu.memory_space<vmem>>, vector<16x128xbf16>
    tpu.vector_store %arg11[%c0_14, %c0_15], %31 {strides = array<i32>} : memref<16x128xbf16, #tpu.memory_space<vmem>>, vector<16x128xbf16>,
    %c0_16 = arith.constant 0 : index
    %c0_17 = arith.constant 0 : index
    %33 = vector.load %arg6[%c0_16, %c0_17] : memref<128x128xbf16, #tpu.memory_space<vmem>>, vector<128x128xbf16>
    %cst_18 = arith.constant dense<0.000000e+00> : vector<16x128xf32>
    %34 = tpu.matmul %25, %33, %cst_18 {dimension_numbers = #tpu.dot_dimension_numbers<[1], [0], [0], [1], [0, 0, 1, 1], [], []>} : vector<16x128xbf16>, vector<128x128xbf16>, vector<16x128xf32> -> vector<16x128xf32>
    %c0_19 = arith.constant 0 : index
    %c0_20 = arith.constant 0 : index
    %35 = vector.load %arg9[%c0_19, %c0_20] : memref<1x128xf32, #tpu.memory_space<vmem>>, vector<1x128xf32>
    %36 = vector.broadcast %35 : vector<1x128xf32> to vector<16x128xf32>
    %37 = arith.addf %34, %36 : vector<16x128xf32>
    %38 = arith.truncf %37 : vector<16x128xf32> to vector<16x128xbf16>
    %c0_21 = arith.constant 0 : index
    %c0_22 = arith.constant 0 : index
    %39 = vector.load %arg12[%c0_21, %c0_22] : memref<16x128xbf16, #tpu.memory_space<vmem>>, vector<16x128xbf16>
    tpu.vector_store %arg12[%c0_21, %c0_22], %38 {strides = array<i32>} : memref<16x128xbf16, #tpu.memory_space<vmem>>, vector<16x128xbf16>,
    %c0_23 = arith.constant 0 : index
    %c0_24 = arith.constant 0 : index
    %40 = vector.load %arg7[%c0_23, %c0_24] : memref<128x128xbf16, #tpu.memory_space<vmem>>, vector<128x128xbf16>
    %cst_25 = arith.constant dense<0.000000e+00> : vector<16x128xf32>
    %41 = tpu.matmul %25, %40, %cst_25 {dimension_numbers = #tpu.dot_dimension_numbers<[1], [0], [0], [1], [0, 0, 1, 1], [], []>} : vector<16x128xbf16>, vector<128x128xbf16>, vector<16x128xf32> -> vector<16x128xf32>
    %c0_26 = arith.constant 0 : index
    %c0_27 = arith.constant 0 : index
    %42 = vector.load %arg10[%c0_26, %c0_27] : memref<1x128xf32, #tpu.memory_space<vmem>>, vector<1x128xf32>
    %43 = vector.broadcast %42 : vector<1x128xf32> to vector<16x128xf32>
    %44 = arith.addf %41, %43 : vector<16x128xf32>
    %45 = arith.truncf %44 : vector<16x128xf32> to vector<16x128xbf16>
    %c0_28 = arith.constant 0 : index
    %c0_29 = arith.constant 0 : index
    %46 = vector.load %arg13[%c0_28, %c0_29] : memref<16x128xbf16, #tpu.memory_space<vmem>>, vector<16x128xbf16>
    tpu.vector_store %arg13[%c0_28, %c0_29], %45 {strides = array<i32>} : memref<16x128xbf16, #tpu.memory_space<vmem>>, vector<16x128xbf16>,
    return
  }
  func.func @transform_0(%arg0: i32, %arg1: i32) -> (i32, i32) {
    %c0_i32 = arith.constant 0 : i32
    %c0_i32_0 = arith.constant 0 : i32
    return %arg1, %c0_i32 : i32, i32
  }
  func.func @transform_1(%arg0: i32, %arg1: i32) -> (i32, i32) {
    %c0_i32 = arith.constant 0 : i32
    %c0_i32_0 = arith.constant 0 : i32
    %c0_i32_1 = arith.constant 0 : i32
    return %c0_i32, %c0_i32_0 : i32, i32
  }
  func.func @transform_2(%arg0: i32, %arg1: i32) -> (i32, i32) {
    %c0_i32 = arith.constant 0 : i32
    %c0_i32_0 = arith.constant 0 : i32
    %c0_i32_1 = arith.constant 0 : i32
    return %c0_i32, %c0_i32_0 : i32, i32
  }
  func.func @transform_3(%arg0: i32, %arg1: i32) -> (i32, i32) {
    %c0_i32 = arith.constant 0 : i32
    %c0_i32_0 = arith.constant 0 : i32
    return %c0_i32, %arg0 : i32, i32
  }
  func.func @transform_4(%arg0: i32, %arg1: i32) -> (i32, i32) {
    %c0_i32 = arith.constant 0 : i32
    %c0_i32_0 = arith.constant 0 : i32
    return %c0_i32, %arg0 : i32, i32
  }
  func.func @transform_5(%arg0: i32, %arg1: i32) -> (i32, i32) {
    %c0_i32 = arith.constant 0 : i32
    %c0_i32_0 = arith.constant 0 : i32
    return %c0_i32, %arg0 : i32, i32
  }
  func.func @transform_6(%arg0: i32, %arg1: i32) -> (i32, i32) {
    %c0_i32 = arith.constant 0 : i32
    %c0_i32_0 = arith.constant 0 : i32
    return %c0_i32, %arg0 : i32, i32
  }
  func.func @transform_7(%arg0: i32, %arg1: i32) -> (i32, i32) {
    %c0_i32 = arith.constant 0 : i32
    %c0_i32_0 = arith.constant 0 : i32
    return %c0_i32, %arg0 : i32, i32
  }
  func.func @transform_8(%arg0: i32, %arg1: i32) -> (i32, i32) {
    %c0_i32 = arith.constant 0 : i32
    %c0_i32_0 = arith.constant 0 : i32
    return %c0_i32, %arg0 : i32, i32
  }
  func.func @transform_9(%arg0: i32, %arg1: i32) -> (i32, i32) {
    %c0_i32 = arith.constant 0 : i32
    return %arg1, %arg0 : i32, i32
  }
  func.func @transform_10(%arg0: i32, %arg1: i32) -> (i32, i32) {
    %c0_i32 = arith.constant 0 : i32
    return %arg1, %arg0 : i32, i32
  }
  func.func @transform_11(%arg0: i32, %arg1: i32) -> (i32, i32) {
    %c0_i32 = arith.constant 0 : i32
    return %arg1, %arg0 : i32, i32
  }
}

module attributes {stable_mosaic.version = 11 : i64} {
  func.func @_grouped_sdpa_kernel(%arg0: i32, %arg1: memref<2x32x16xbf16, #tpu.memory_space<vmem>>, %arg2: memref<2x32x16xbf16, #tpu.memory_space<vmem>>, %arg3: memref<2x32x16xbf16, #tpu.memory_space<vmem>>, %arg4: memref<2x32x16xf32, #tpu.memory_space<vmem>>) attributes {dimension_semantics = [#tpu.dimension_semantics<parallel>], iteration_bounds = array<i64: 1>, scalar_prefetch = 0 : i64, scratch_operands = 0 : i64, tpu.core_type = #tpu.core_type<tc>, window_params = [{transform_indices = @transform_0, window_bounds = array<i64: 2, 32, 16>}, {transform_indices = @transform_1, window_bounds = array<i64: 2, 32, 16>}, {transform_indices = @transform_2, window_bounds = array<i64: 2, 32, 16>}, {transform_indices = @transform_3, window_bounds = array<i64: 2, 32, 16>}]} {
    %c0 = arith.constant 0 : index
    %c0_0 = arith.constant 0 : index
    %c0_1 = arith.constant 0 : index
    %0 = vector.load %arg1[%c0, %c0_0, %c0_1] : memref<2x32x16xbf16, #tpu.memory_space<vmem>>, vector<2x32x16xbf16>
    %1 = arith.extf %0 : vector<2x32x16xbf16> to vector<2x32x16xf32>
    %c0_2 = arith.constant 0 : index
    %c0_3 = arith.constant 0 : index
    %c0_4 = arith.constant 0 : index
    %2 = vector.load %arg2[%c0_2, %c0_3, %c0_4] : memref<2x32x16xbf16, #tpu.memory_space<vmem>>, vector<2x32x16xbf16>
    %3 = arith.extf %2 : vector<2x32x16xbf16> to vector<2x32x16xf32>
    %c0_5 = arith.constant 0 : index
    %c0_6 = arith.constant 0 : index
    %c0_7 = arith.constant 0 : index
    %4 = vector.load %arg3[%c0_5, %c0_6, %c0_7] : memref<2x32x16xbf16, #tpu.memory_space<vmem>>, vector<2x32x16xbf16>
    %5 = arith.extf %4 : vector<2x32x16xbf16> to vector<2x32x16xf32>
    %6 = vector.extract_strided_slice %1 {offsets = [0, 0, 0], sizes = [1, 32, 16], strides = [1, 1, 1]} : vector<2x32x16xf32> to vector<1x32x16xf32>
    %7 = vector.shape_cast %6 : vector<1x32x16xf32> to vector<32x16xf32>
    %8 = vector.extract_strided_slice %3 {offsets = [0, 0, 0], sizes = [1, 32, 16], strides = [1, 1, 1]} : vector<2x32x16xf32> to vector<1x32x16xf32>
    %9 = vector.shape_cast %8 : vector<1x32x16xf32> to vector<32x16xf32>
    %10 = arith.mulf %7, %9 : vector<32x16xf32>
    %cst = arith.constant dense<0.000000e+00> : vector<16xf32>
    %11 = vector.multi_reduction <add>, %10, %cst [0] : vector<32x16xf32> to vector<16xf32>
    %12 = vector.shape_cast %11 : vector<16xf32> to vector<1x16xf32>
    %cst_8 = arith.constant 0.176776692 : f32
    %13 = vector.broadcast %cst_8 : f32 to vector<1x16xf32>
    %14 = arith.mulf %12, %13 : vector<1x16xf32>
    %15 = vector.extract_strided_slice %1 {offsets = [0, 0, 0], sizes = [1, 32, 16], strides = [1, 1, 1]} : vector<2x32x16xf32> to vector<1x32x16xf32>
    %16 = vector.shape_cast %15 : vector<1x32x16xf32> to vector<32x16xf32>
    %17 = vector.extract_strided_slice %3 {offsets = [1, 0, 0], sizes = [1, 32, 16], strides = [1, 1, 1]} : vector<2x32x16xf32> to vector<1x32x16xf32>
    %18 = vector.shape_cast %17 : vector<1x32x16xf32> to vector<32x16xf32>
    %19 = arith.mulf %16, %18 : vector<32x16xf32>
    %cst_9 = arith.constant dense<0.000000e+00> : vector<16xf32>
    %20 = vector.multi_reduction <add>, %19, %cst_9 [0] : vector<32x16xf32> to vector<16xf32>
    %21 = vector.shape_cast %20 : vector<16xf32> to vector<1x16xf32>
    %cst_10 = arith.constant 0.176776692 : f32
    %22 = vector.broadcast %cst_10 : f32 to vector<1x16xf32>
    %23 = arith.mulf %21, %22 : vector<1x16xf32>
    %24 = arith.maximumf %14, %23 : vector<1x16xf32>
    %25 = arith.subf %14, %24 : vector<1x16xf32>
    %26 = math.exp %25 : vector<1x16xf32>
    %27 = arith.subf %23, %24 : vector<1x16xf32>
    %28 = math.exp %27 : vector<1x16xf32>
    %29 = arith.addf %26, %28 : vector<1x16xf32>
    %30 = tpu.reciprocal %29 {approx = true} : vector<1x16xf32> -> vector<1x16xf32>
    %31 = arith.mulf %26, %30 : vector<1x16xf32>
    %32 = vector.extract_strided_slice %5 {offsets = [0, 0, 0], sizes = [1, 32, 16], strides = [1, 1, 1]} : vector<2x32x16xf32> to vector<1x32x16xf32>
    %33 = vector.shape_cast %32 : vector<1x32x16xf32> to vector<32x16xf32>
    %34 = vector.broadcast %31 : vector<1x16xf32> to vector<32x16xf32>
    %35 = arith.mulf %34, %33 : vector<32x16xf32>
    %36 = arith.mulf %28, %30 : vector<1x16xf32>
    %37 = vector.extract_strided_slice %5 {offsets = [1, 0, 0], sizes = [1, 32, 16], strides = [1, 1, 1]} : vector<2x32x16xf32> to vector<1x32x16xf32>
    %38 = vector.shape_cast %37 : vector<1x32x16xf32> to vector<32x16xf32>
    %39 = vector.broadcast %36 : vector<1x16xf32> to vector<32x16xf32>
    %40 = arith.mulf %39, %38 : vector<32x16xf32>
    %41 = arith.addf %35, %40 : vector<32x16xf32>
    %c0_11 = arith.constant 0 : index
    %c0_12 = arith.constant 0 : index
    %c0_13 = arith.constant 0 : index
    %42 = vector.load %arg4[%c0_11, %c0_12, %c0_13] : memref<2x32x16xf32, #tpu.memory_space<vmem>>, vector<1x32x16xf32>
    %43 = vector.shape_cast %42 : vector<1x32x16xf32> to vector<32x16xf32>
    %44 = vector.shape_cast %41 : vector<32x16xf32> to vector<1x32x16xf32>
    tpu.vector_store %arg4[%c0_11, %c0_12, %c0_13], %44 {strides = array<i32>} : memref<2x32x16xf32, #tpu.memory_space<vmem>>, vector<1x32x16xf32>,
    %45 = vector.extract_strided_slice %1 {offsets = [1, 0, 0], sizes = [1, 32, 16], strides = [1, 1, 1]} : vector<2x32x16xf32> to vector<1x32x16xf32>
    %46 = vector.shape_cast %45 : vector<1x32x16xf32> to vector<32x16xf32>
    %47 = vector.extract_strided_slice %3 {offsets = [0, 0, 0], sizes = [1, 32, 16], strides = [1, 1, 1]} : vector<2x32x16xf32> to vector<1x32x16xf32>
    %48 = vector.shape_cast %47 : vector<1x32x16xf32> to vector<32x16xf32>
    %49 = arith.mulf %46, %48 : vector<32x16xf32>
    %cst_14 = arith.constant dense<0.000000e+00> : vector<16xf32>
    %50 = vector.multi_reduction <add>, %49, %cst_14 [0] : vector<32x16xf32> to vector<16xf32>
    %51 = vector.shape_cast %50 : vector<16xf32> to vector<1x16xf32>
    %cst_15 = arith.constant 0.176776692 : f32
    %52 = vector.broadcast %cst_15 : f32 to vector<1x16xf32>
    %53 = arith.mulf %51, %52 : vector<1x16xf32>
    %54 = vector.extract_strided_slice %1 {offsets = [1, 0, 0], sizes = [1, 32, 16], strides = [1, 1, 1]} : vector<2x32x16xf32> to vector<1x32x16xf32>
    %55 = vector.shape_cast %54 : vector<1x32x16xf32> to vector<32x16xf32>
    %56 = vector.extract_strided_slice %3 {offsets = [1, 0, 0], sizes = [1, 32, 16], strides = [1, 1, 1]} : vector<2x32x16xf32> to vector<1x32x16xf32>
    %57 = vector.shape_cast %56 : vector<1x32x16xf32> to vector<32x16xf32>
    %58 = arith.mulf %55, %57 : vector<32x16xf32>
    %cst_16 = arith.constant dense<0.000000e+00> : vector<16xf32>
    %59 = vector.multi_reduction <add>, %58, %cst_16 [0] : vector<32x16xf32> to vector<16xf32>
    %60 = vector.shape_cast %59 : vector<16xf32> to vector<1x16xf32>
    %cst_17 = arith.constant 0.176776692 : f32
    %61 = vector.broadcast %cst_17 : f32 to vector<1x16xf32>
    %62 = arith.mulf %60, %61 : vector<1x16xf32>
    %63 = arith.maximumf %53, %62 : vector<1x16xf32>
    %64 = arith.subf %53, %63 : vector<1x16xf32>
    %65 = math.exp %64 : vector<1x16xf32>
    %66 = arith.subf %62, %63 : vector<1x16xf32>
    %67 = math.exp %66 : vector<1x16xf32>
    %68 = arith.addf %65, %67 : vector<1x16xf32>
    %69 = tpu.reciprocal %68 {approx = true} : vector<1x16xf32> -> vector<1x16xf32>
    %70 = arith.mulf %65, %69 : vector<1x16xf32>
    %71 = vector.extract_strided_slice %5 {offsets = [0, 0, 0], sizes = [1, 32, 16], strides = [1, 1, 1]} : vector<2x32x16xf32> to vector<1x32x16xf32>
    %72 = vector.shape_cast %71 : vector<1x32x16xf32> to vector<32x16xf32>
    %73 = vector.broadcast %70 : vector<1x16xf32> to vector<32x16xf32>
    %74 = arith.mulf %73, %72 : vector<32x16xf32>
    %75 = arith.mulf %67, %69 : vector<1x16xf32>
    %76 = vector.extract_strided_slice %5 {offsets = [1, 0, 0], sizes = [1, 32, 16], strides = [1, 1, 1]} : vector<2x32x16xf32> to vector<1x32x16xf32>
    %77 = vector.shape_cast %76 : vector<1x32x16xf32> to vector<32x16xf32>
    %78 = vector.broadcast %75 : vector<1x16xf32> to vector<32x16xf32>
    %79 = arith.mulf %78, %77 : vector<32x16xf32>
    %80 = arith.addf %74, %79 : vector<32x16xf32>
    %c1 = arith.constant 1 : index
    %c0_18 = arith.constant 0 : index
    %c0_19 = arith.constant 0 : index
    %81 = vector.load %arg4[%c1, %c0_18, %c0_19] : memref<2x32x16xf32, #tpu.memory_space<vmem>>, vector<1x32x16xf32>
    %82 = vector.shape_cast %81 : vector<1x32x16xf32> to vector<32x16xf32>
    %83 = vector.shape_cast %80 : vector<32x16xf32> to vector<1x32x16xf32>
    tpu.vector_store %arg4[%c1, %c0_18, %c0_19], %83 {strides = array<i32>} : memref<2x32x16xf32, #tpu.memory_space<vmem>>, vector<1x32x16xf32>,
    return
  }
  func.func @transform_0(%arg0: i32) -> (i32, i32, i32) {
    %c0_i32 = arith.constant 0 : i32
    %c0_i32_0 = arith.constant 0 : i32
    %c0_i32_1 = arith.constant 0 : i32
    return %c0_i32, %c0_i32_0, %arg0 : i32, i32, i32
  }
  func.func @transform_1(%arg0: i32) -> (i32, i32, i32) {
    %c0_i32 = arith.constant 0 : i32
    %c0_i32_0 = arith.constant 0 : i32
    %c0_i32_1 = arith.constant 0 : i32
    return %c0_i32, %c0_i32_0, %arg0 : i32, i32, i32
  }
  func.func @transform_2(%arg0: i32) -> (i32, i32, i32) {
    %c0_i32 = arith.constant 0 : i32
    %c0_i32_0 = arith.constant 0 : i32
    %c0_i32_1 = arith.constant 0 : i32
    return %c0_i32, %c0_i32_0, %arg0 : i32, i32, i32
  }
  func.func @transform_3(%arg0: i32) -> (i32, i32, i32) {
    %c0_i32 = arith.constant 0 : i32
    %c0_i32_0 = arith.constant 0 : i32
    %c0_i32_1 = arith.constant 0 : i32
    return %c0_i32, %c0_i32_0, %arg0 : i32, i32, i32
  }
}

module attributes {stable_mosaic.version = 11 : i64} {
  func.func @_grouped_sdpa_kernel(%arg0: i32, %arg1: memref<2x32x8xbf16, #tpu.memory_space<vmem>>, %arg2: memref<2x32x8xbf16, #tpu.memory_space<vmem>>, %arg3: memref<2x32x8xbf16, #tpu.memory_space<vmem>>, %arg4: memref<2x32x8xf32, #tpu.memory_space<vmem>>) attributes {dimension_semantics = [#tpu.dimension_semantics<parallel>], iteration_bounds = array<i64: 1>, scalar_prefetch = 0 : i64, scratch_operands = 0 : i64, tpu.core_type = #tpu.core_type<tc>, window_params = [{transform_indices = @transform_0, window_bounds = array<i64: 2, 32, 8>}, {transform_indices = @transform_1, window_bounds = array<i64: 2, 32, 8>}, {transform_indices = @transform_2, window_bounds = array<i64: 2, 32, 8>}, {transform_indices = @transform_3, window_bounds = array<i64: 2, 32, 8>}]} {
    %c0 = arith.constant 0 : index
    %c0_0 = arith.constant 0 : index
    %c0_1 = arith.constant 0 : index
    %0 = vector.load %arg1[%c0, %c0_0, %c0_1] : memref<2x32x8xbf16, #tpu.memory_space<vmem>>, vector<2x32x8xbf16>
    %1 = arith.extf %0 : vector<2x32x8xbf16> to vector<2x32x8xf32>
    %c0_2 = arith.constant 0 : index
    %c0_3 = arith.constant 0 : index
    %c0_4 = arith.constant 0 : index
    %2 = vector.load %arg2[%c0_2, %c0_3, %c0_4] : memref<2x32x8xbf16, #tpu.memory_space<vmem>>, vector<2x32x8xbf16>
    %3 = arith.extf %2 : vector<2x32x8xbf16> to vector<2x32x8xf32>
    %c0_5 = arith.constant 0 : index
    %c0_6 = arith.constant 0 : index
    %c0_7 = arith.constant 0 : index
    %4 = vector.load %arg3[%c0_5, %c0_6, %c0_7] : memref<2x32x8xbf16, #tpu.memory_space<vmem>>, vector<2x32x8xbf16>
    %5 = arith.extf %4 : vector<2x32x8xbf16> to vector<2x32x8xf32>
    %6 = vector.extract_strided_slice %1 {offsets = [0, 0, 0], sizes = [1, 32, 8], strides = [1, 1, 1]} : vector<2x32x8xf32> to vector<1x32x8xf32>
    %7 = vector.shape_cast %6 : vector<1x32x8xf32> to vector<32x8xf32>
    %8 = vector.extract_strided_slice %3 {offsets = [0, 0, 0], sizes = [1, 32, 8], strides = [1, 1, 1]} : vector<2x32x8xf32> to vector<1x32x8xf32>
    %9 = vector.shape_cast %8 : vector<1x32x8xf32> to vector<32x8xf32>
    %10 = arith.mulf %7, %9 : vector<32x8xf32>
    %cst = arith.constant dense<0.000000e+00> : vector<8xf32>
    %11 = vector.multi_reduction <add>, %10, %cst [0] : vector<32x8xf32> to vector<8xf32>
    %12 = vector.shape_cast %11 : vector<8xf32> to vector<1x8xf32>
    %cst_8 = arith.constant 0.176776692 : f32
    %13 = vector.broadcast %cst_8 : f32 to vector<1x8xf32>
    %14 = arith.mulf %12, %13 : vector<1x8xf32>
    %15 = vector.extract_strided_slice %1 {offsets = [0, 0, 0], sizes = [1, 32, 8], strides = [1, 1, 1]} : vector<2x32x8xf32> to vector<1x32x8xf32>
    %16 = vector.shape_cast %15 : vector<1x32x8xf32> to vector<32x8xf32>
    %17 = vector.extract_strided_slice %3 {offsets = [1, 0, 0], sizes = [1, 32, 8], strides = [1, 1, 1]} : vector<2x32x8xf32> to vector<1x32x8xf32>
    %18 = vector.shape_cast %17 : vector<1x32x8xf32> to vector<32x8xf32>
    %19 = arith.mulf %16, %18 : vector<32x8xf32>
    %cst_9 = arith.constant dense<0.000000e+00> : vector<8xf32>
    %20 = vector.multi_reduction <add>, %19, %cst_9 [0] : vector<32x8xf32> to vector<8xf32>
    %21 = vector.shape_cast %20 : vector<8xf32> to vector<1x8xf32>
    %cst_10 = arith.constant 0.176776692 : f32
    %22 = vector.broadcast %cst_10 : f32 to vector<1x8xf32>
    %23 = arith.mulf %21, %22 : vector<1x8xf32>
    %24 = arith.maximumf %14, %23 : vector<1x8xf32>
    %25 = arith.subf %14, %24 : vector<1x8xf32>
    %26 = math.exp %25 : vector<1x8xf32>
    %27 = arith.subf %23, %24 : vector<1x8xf32>
    %28 = math.exp %27 : vector<1x8xf32>
    %29 = arith.addf %26, %28 : vector<1x8xf32>
    %30 = tpu.reciprocal %29 {approx = true} : vector<1x8xf32> -> vector<1x8xf32>
    %31 = arith.mulf %26, %30 : vector<1x8xf32>
    %32 = vector.extract_strided_slice %5 {offsets = [0, 0, 0], sizes = [1, 32, 8], strides = [1, 1, 1]} : vector<2x32x8xf32> to vector<1x32x8xf32>
    %33 = vector.shape_cast %32 : vector<1x32x8xf32> to vector<32x8xf32>
    %34 = vector.broadcast %31 : vector<1x8xf32> to vector<32x8xf32>
    %35 = arith.mulf %34, %33 : vector<32x8xf32>
    %36 = arith.mulf %28, %30 : vector<1x8xf32>
    %37 = vector.extract_strided_slice %5 {offsets = [1, 0, 0], sizes = [1, 32, 8], strides = [1, 1, 1]} : vector<2x32x8xf32> to vector<1x32x8xf32>
    %38 = vector.shape_cast %37 : vector<1x32x8xf32> to vector<32x8xf32>
    %39 = vector.broadcast %36 : vector<1x8xf32> to vector<32x8xf32>
    %40 = arith.mulf %39, %38 : vector<32x8xf32>
    %41 = arith.addf %35, %40 : vector<32x8xf32>
    %c0_11 = arith.constant 0 : index
    %c0_12 = arith.constant 0 : index
    %c0_13 = arith.constant 0 : index
    %42 = vector.load %arg4[%c0_11, %c0_12, %c0_13] : memref<2x32x8xf32, #tpu.memory_space<vmem>>, vector<1x32x8xf32>
    %43 = vector.shape_cast %42 : vector<1x32x8xf32> to vector<32x8xf32>
    %44 = vector.shape_cast %41 : vector<32x8xf32> to vector<1x32x8xf32>
    tpu.vector_store %arg4[%c0_11, %c0_12, %c0_13], %44 {strides = array<i32>} : memref<2x32x8xf32, #tpu.memory_space<vmem>>, vector<1x32x8xf32>,
    %45 = vector.extract_strided_slice %1 {offsets = [1, 0, 0], sizes = [1, 32, 8], strides = [1, 1, 1]} : vector<2x32x8xf32> to vector<1x32x8xf32>
    %46 = vector.shape_cast %45 : vector<1x32x8xf32> to vector<32x8xf32>
    %47 = vector.extract_strided_slice %3 {offsets = [0, 0, 0], sizes = [1, 32, 8], strides = [1, 1, 1]} : vector<2x32x8xf32> to vector<1x32x8xf32>
    %48 = vector.shape_cast %47 : vector<1x32x8xf32> to vector<32x8xf32>
    %49 = arith.mulf %46, %48 : vector<32x8xf32>
    %cst_14 = arith.constant dense<0.000000e+00> : vector<8xf32>
    %50 = vector.multi_reduction <add>, %49, %cst_14 [0] : vector<32x8xf32> to vector<8xf32>
    %51 = vector.shape_cast %50 : vector<8xf32> to vector<1x8xf32>
    %cst_15 = arith.constant 0.176776692 : f32
    %52 = vector.broadcast %cst_15 : f32 to vector<1x8xf32>
    %53 = arith.mulf %51, %52 : vector<1x8xf32>
    %54 = vector.extract_strided_slice %1 {offsets = [1, 0, 0], sizes = [1, 32, 8], strides = [1, 1, 1]} : vector<2x32x8xf32> to vector<1x32x8xf32>
    %55 = vector.shape_cast %54 : vector<1x32x8xf32> to vector<32x8xf32>
    %56 = vector.extract_strided_slice %3 {offsets = [1, 0, 0], sizes = [1, 32, 8], strides = [1, 1, 1]} : vector<2x32x8xf32> to vector<1x32x8xf32>
    %57 = vector.shape_cast %56 : vector<1x32x8xf32> to vector<32x8xf32>
    %58 = arith.mulf %55, %57 : vector<32x8xf32>
    %cst_16 = arith.constant dense<0.000000e+00> : vector<8xf32>
    %59 = vector.multi_reduction <add>, %58, %cst_16 [0] : vector<32x8xf32> to vector<8xf32>
    %60 = vector.shape_cast %59 : vector<8xf32> to vector<1x8xf32>
    %cst_17 = arith.constant 0.176776692 : f32
    %61 = vector.broadcast %cst_17 : f32 to vector<1x8xf32>
    %62 = arith.mulf %60, %61 : vector<1x8xf32>
    %63 = arith.maximumf %53, %62 : vector<1x8xf32>
    %64 = arith.subf %53, %63 : vector<1x8xf32>
    %65 = math.exp %64 : vector<1x8xf32>
    %66 = arith.subf %62, %63 : vector<1x8xf32>
    %67 = math.exp %66 : vector<1x8xf32>
    %68 = arith.addf %65, %67 : vector<1x8xf32>
    %69 = tpu.reciprocal %68 {approx = true} : vector<1x8xf32> -> vector<1x8xf32>
    %70 = arith.mulf %65, %69 : vector<1x8xf32>
    %71 = vector.extract_strided_slice %5 {offsets = [0, 0, 0], sizes = [1, 32, 8], strides = [1, 1, 1]} : vector<2x32x8xf32> to vector<1x32x8xf32>
    %72 = vector.shape_cast %71 : vector<1x32x8xf32> to vector<32x8xf32>
    %73 = vector.broadcast %70 : vector<1x8xf32> to vector<32x8xf32>
    %74 = arith.mulf %73, %72 : vector<32x8xf32>
    %75 = arith.mulf %67, %69 : vector<1x8xf32>
    %76 = vector.extract_strided_slice %5 {offsets = [1, 0, 0], sizes = [1, 32, 8], strides = [1, 1, 1]} : vector<2x32x8xf32> to vector<1x32x8xf32>
    %77 = vector.shape_cast %76 : vector<1x32x8xf32> to vector<32x8xf32>
    %78 = vector.broadcast %75 : vector<1x8xf32> to vector<32x8xf32>
    %79 = arith.mulf %78, %77 : vector<32x8xf32>
    %80 = arith.addf %74, %79 : vector<32x8xf32>
    %c1 = arith.constant 1 : index
    %c0_18 = arith.constant 0 : index
    %c0_19 = arith.constant 0 : index
    %81 = vector.load %arg4[%c1, %c0_18, %c0_19] : memref<2x32x8xf32, #tpu.memory_space<vmem>>, vector<1x32x8xf32>
    %82 = vector.shape_cast %81 : vector<1x32x8xf32> to vector<32x8xf32>
    %83 = vector.shape_cast %80 : vector<32x8xf32> to vector<1x32x8xf32>
    tpu.vector_store %arg4[%c1, %c0_18, %c0_19], %83 {strides = array<i32>} : memref<2x32x8xf32, #tpu.memory_space<vmem>>, vector<1x32x8xf32>,
    return
  }
  func.func @transform_0(%arg0: i32) -> (i32, i32, i32) {
    %c0_i32 = arith.constant 0 : i32
    %c0_i32_0 = arith.constant 0 : i32
    %c0_i32_1 = arith.constant 0 : i32
    return %c0_i32, %c0_i32_0, %arg0 : i32, i32, i32
  }
  func.func @transform_1(%arg0: i32) -> (i32, i32, i32) {
    %c0_i32 = arith.constant 0 : i32
    %c0_i32_0 = arith.constant 0 : i32
    %c0_i32_1 = arith.constant 0 : i32
    return %c0_i32, %c0_i32_0, %arg0 : i32, i32, i32
  }
  func.func @transform_2(%arg0: i32) -> (i32, i32, i32) {
    %c0_i32 = arith.constant 0 : i32
    %c0_i32_0 = arith.constant 0 : i32
    %c0_i32_1 = arith.constant 0 : i32
    return %c0_i32, %c0_i32_0, %arg0 : i32, i32, i32
  }
  func.func @transform_3(%arg0: i32) -> (i32, i32, i32) {
    %c0_i32 = arith.constant 0 : i32
    %c0_i32_0 = arith.constant 0 : i32
    %c0_i32_1 = arith.constant 0 : i32
    return %c0_i32, %c0_i32_0, %arg0 : i32, i32, i32
  }
}

module attributes {stable_mosaic.version = 11 : i64} {
  func.func @_ln_matmul_kernel(%arg0: i32, %arg1: i32, %arg2: memref<16x256xbf16, #tpu.memory_space<vmem>>, %arg3: memref<1x256xf32, #tpu.memory_space<vmem>>, %arg4: memref<1x256xf32, #tpu.memory_space<vmem>>, %arg5: memref<256x128xbf16, #tpu.memory_space<vmem>>, %arg6: memref<1x128xf32, #tpu.memory_space<vmem>>, %arg7: memref<16x128xf32, #tpu.memory_space<vmem>>, %arg8: memref<16x128xf32, #tpu.memory_space<vmem>>) attributes {dimension_semantics = [#tpu.dimension_semantics<parallel>, #tpu.dimension_semantics<parallel>], iteration_bounds = array<i64: 1, 1>, scalar_prefetch = 0 : i64, scratch_operands = 0 : i64, tpu.core_type = #tpu.core_type<tc>, window_params = [{transform_indices = @transform_0, window_bounds = array<i64: 16, 256>}, {pipeline_mode = #tpu.pipeline_mode<synchronous>, transform_indices = @transform_1, window_bounds = array<i64: 1, 256>}, {pipeline_mode = #tpu.pipeline_mode<synchronous>, transform_indices = @transform_2, window_bounds = array<i64: 1, 256>}, {transform_indices = @transform_3, window_bounds = array<i64: 256, 128>}, {transform_indices = @transform_4, window_bounds = array<i64: 1, 128>}, {transform_indices = @transform_5, window_bounds = array<i64: 16, 128>}, {transform_indices = @transform_6, window_bounds = array<i64: 16, 128>}]} {
    %c0 = arith.constant 0 : index
    %c0_0 = arith.constant 0 : index
    %0 = vector.load %arg2[%c0, %c0_0] : memref<16x256xbf16, #tpu.memory_space<vmem>>, vector<16x256xbf16>
    %1 = arith.extf %0 : vector<16x256xbf16> to vector<16x256xf32>
    %cst = arith.constant dense<0.000000e+00> : vector<16xf32>
    %2 = vector.multi_reduction <add>, %1, %cst [1] : vector<16x256xf32> to vector<16xf32>
    %3 = vector.shape_cast %2 : vector<16xf32> to vector<16x1xf32>
    %cst_1 = arith.constant 2.560000e+02 : f32
    %4 = vector.broadcast %cst_1 : f32 to vector<16x1xf32>
    %5 = arith.divf %3, %4 : vector<16x1xf32>
    %6 = vector.broadcast %5 : vector<16x1xf32> to vector<16x256xf32>
    %7 = arith.subf %1, %6 : vector<16x256xf32>
    %8 = arith.mulf %7, %7 : vector<16x256xf32>
    %cst_2 = arith.constant dense<0.000000e+00> : vector<16xf32>
    %9 = vector.multi_reduction <add>, %8, %cst_2 [1] : vector<16x256xf32> to vector<16xf32>
    %10 = vector.shape_cast %9 : vector<16xf32> to vector<16x1xf32>
    %cst_3 = arith.constant 2.560000e+02 : f32
    %11 = vector.broadcast %cst_3 : f32 to vector<16x1xf32>
    %12 = arith.divf %10, %11 : vector<16x1xf32>
    %13 = vector.broadcast %5 : vector<16x1xf32> to vector<16x256xf32>
    %14 = arith.subf %1, %13 : vector<16x256xf32>
    %cst_4 = arith.constant 9.99999974E-6 : f32
    %15 = vector.broadcast %cst_4 : f32 to vector<16x1xf32>
    %16 = arith.addf %12, %15 : vector<16x1xf32>
    %17 = math.rsqrt %16 : vector<16x1xf32>
    %18 = vector.broadcast %17 : vector<16x1xf32> to vector<16x256xf32>
    %19 = arith.mulf %14, %18 : vector<16x256xf32>
    %c0_5 = arith.constant 0 : index
    %c0_6 = arith.constant 0 : index
    %20 = vector.load %arg3[%c0_5, %c0_6] : memref<1x256xf32, #tpu.memory_space<vmem>>, vector<1x256xf32>
    %21 = vector.broadcast %20 : vector<1x256xf32> to vector<16x256xf32>
    %22 = arith.mulf %19, %21 : vector<16x256xf32>
    %c0_7 = arith.constant 0 : index
    %c0_8 = arith.constant 0 : index
    %23 = vector.load %arg4[%c0_7, %c0_8] : memref<1x256xf32, #tpu.memory_space<vmem>>, vector<1x256xf32>
    %24 = vector.broadcast %23 : vector<1x256xf32> to vector<16x256xf32>
    %25 = arith.addf %22, %24 : vector<16x256xf32>
    %26 = arith.truncf %25 : vector<16x256xf32> to vector<16x256xbf16>
    %c0_9 = arith.constant 0 : index
    %c0_10 = arith.constant 0 : index
    %27 = vector.load %arg5[%c0_9, %c0_10] : memref<256x128xbf16, #tpu.memory_space<vmem>>, vector<256x128xbf16>
    %cst_11 = arith.constant dense<0.000000e+00> : vector<16x128xf32>
    %28 = tpu.matmul %26, %27, %cst_11 {dimension_numbers = #tpu.dot_dimension_numbers<[1], [0], [0], [1], [0, 0, 1, 1], [], []>} : vector<16x256xbf16>, vector<256x128xbf16>, vector<16x128xf32> -> vector<16x128xf32>
    %c0_12 = arith.constant 0 : index
    %c0_13 = arith.constant 0 : index
    %29 = vector.load %arg6[%c0_12, %c0_13] : memref<1x128xf32, #tpu.memory_space<vmem>>, vector<1x128xf32>
    %30 = vector.broadcast %29 : vector<1x128xf32> to vector<16x128xf32>
    %31 = arith.addf %28, %30 : vector<16x128xf32>
    %c0_14 = arith.constant 0 : index
    %c0_15 = arith.constant 0 : index
    %32 = vector.load %arg7[%c0_14, %c0_15] : memref<16x128xf32, #tpu.memory_space<vmem>>, vector<16x128xf32>
    %33 = arith.addf %31, %32 : vector<16x128xf32>
    %c0_16 = arith.constant 0 : index
    %c0_17 = arith.constant 0 : index
    %34 = vector.load %arg8[%c0_16, %c0_17] : memref<16x128xf32, #tpu.memory_space<vmem>>, vector<16x128xf32>
    tpu.vector_store %arg8[%c0_16, %c0_17], %33 {strides = array<i32>} : memref<16x128xf32, #tpu.memory_space<vmem>>, vector<16x128xf32>,
    return
  }
  func.func @transform_0(%arg0: i32, %arg1: i32) -> (i32, i32) {
    %c0_i32 = arith.constant 0 : i32
    %c0_i32_0 = arith.constant 0 : i32
    return %arg1, %c0_i32 : i32, i32
  }
  func.func @transform_1(%arg0: i32, %arg1: i32) -> (i32, i32) {
    %c0_i32 = arith.constant 0 : i32
    %c0_i32_0 = arith.constant 0 : i32
    %c0_i32_1 = arith.constant 0 : i32
    return %c0_i32, %c0_i32_0 : i32, i32
  }
  func.func @transform_2(%arg0: i32, %arg1: i32) -> (i32, i32) {
    %c0_i32 = arith.constant 0 : i32
    %c0_i32_0 = arith.constant 0 : i32
    %c0_i32_1 = arith.constant 0 : i32
    return %c0_i32, %c0_i32_0 : i32, i32
  }
  func.func @transform_3(%arg0: i32, %arg1: i32) -> (i32, i32) {
    %c0_i32 = arith.constant 0 : i32
    %c0_i32_0 = arith.constant 0 : i32
    return %c0_i32, %arg0 : i32, i32
  }
  func.func @transform_4(%arg0: i32, %arg1: i32) -> (i32, i32) {
    %c0_i32 = arith.constant 0 : i32
    %c0_i32_0 = arith.constant 0 : i32
    return %c0_i32, %arg0 : i32, i32
  }
  func.func @transform_5(%arg0: i32, %arg1: i32) -> (i32, i32) {
    %c0_i32 = arith.constant 0 : i32
    return %arg1, %arg0 : i32, i32
  }
  func.func @transform_6(%arg0: i32, %arg1: i32) -> (i32, i32) {
    %c0_i32 = arith.constant 0 : i32
    return %arg1, %arg0 : i32, i32
  }
}

module attributes {stable_mosaic.version = 11 : i64} {
  func.func @_ln_matmul_kernel(%arg0: i32, %arg1: i32, %arg2: memref<16x128xf32, #tpu.memory_space<vmem>>, %arg3: memref<1x128xf32, #tpu.memory_space<vmem>>, %arg4: memref<1x128xf32, #tpu.memory_space<vmem>>, %arg5: memref<128x256xbf16, #tpu.memory_space<vmem>>, %arg6: memref<1x256xf32, #tpu.memory_space<vmem>>, %arg7: memref<16x256xbf16, #tpu.memory_space<vmem>>) attributes {dimension_semantics = [#tpu.dimension_semantics<parallel>, #tpu.dimension_semantics<parallel>], iteration_bounds = array<i64: 1, 1>, scalar_prefetch = 0 : i64, scratch_operands = 0 : i64, tpu.core_type = #tpu.core_type<tc>, window_params = [{transform_indices = @transform_0, window_bounds = array<i64: 16, 128>}, {pipeline_mode = #tpu.pipeline_mode<synchronous>, transform_indices = @transform_1, window_bounds = array<i64: 1, 128>}, {pipeline_mode = #tpu.pipeline_mode<synchronous>, transform_indices = @transform_2, window_bounds = array<i64: 1, 128>}, {transform_indices = @transform_3, window_bounds = array<i64: 128, 256>}, {transform_indices = @transform_4, window_bounds = array<i64: 1, 256>}, {transform_indices = @transform_5, window_bounds = array<i64: 16, 256>}]} {
    %c0 = arith.constant 0 : index
    %c0_0 = arith.constant 0 : index
    %0 = vector.load %arg2[%c0, %c0_0] : memref<16x128xf32, #tpu.memory_space<vmem>>, vector<16x128xf32>
    %cst = arith.constant dense<0.000000e+00> : vector<16xf32>
    %1 = vector.multi_reduction <add>, %0, %cst [1] : vector<16x128xf32> to vector<16xf32>
    %2 = vector.shape_cast %1 : vector<16xf32> to vector<16x1xf32>
    %cst_1 = arith.constant 1.280000e+02 : f32
    %3 = vector.broadcast %cst_1 : f32 to vector<16x1xf32>
    %4 = arith.divf %2, %3 : vector<16x1xf32>
    %5 = vector.broadcast %4 : vector<16x1xf32> to vector<16x128xf32>
    %6 = arith.subf %0, %5 : vector<16x128xf32>
    %7 = arith.mulf %6, %6 : vector<16x128xf32>
    %cst_2 = arith.constant dense<0.000000e+00> : vector<16xf32>
    %8 = vector.multi_reduction <add>, %7, %cst_2 [1] : vector<16x128xf32> to vector<16xf32>
    %9 = vector.shape_cast %8 : vector<16xf32> to vector<16x1xf32>
    %cst_3 = arith.constant 1.280000e+02 : f32
    %10 = vector.broadcast %cst_3 : f32 to vector<16x1xf32>
    %11 = arith.divf %9, %10 : vector<16x1xf32>
    %12 = vector.broadcast %4 : vector<16x1xf32> to vector<16x128xf32>
    %13 = arith.subf %0, %12 : vector<16x128xf32>
    %cst_4 = arith.constant 9.99999974E-6 : f32
    %14 = vector.broadcast %cst_4 : f32 to vector<16x1xf32>
    %15 = arith.addf %11, %14 : vector<16x1xf32>
    %16 = math.rsqrt %15 : vector<16x1xf32>
    %17 = vector.broadcast %16 : vector<16x1xf32> to vector<16x128xf32>
    %18 = arith.mulf %13, %17 : vector<16x128xf32>
    %c0_5 = arith.constant 0 : index
    %c0_6 = arith.constant 0 : index
    %19 = vector.load %arg3[%c0_5, %c0_6] : memref<1x128xf32, #tpu.memory_space<vmem>>, vector<1x128xf32>
    %20 = vector.broadcast %19 : vector<1x128xf32> to vector<16x128xf32>
    %21 = arith.mulf %18, %20 : vector<16x128xf32>
    %c0_7 = arith.constant 0 : index
    %c0_8 = arith.constant 0 : index
    %22 = vector.load %arg4[%c0_7, %c0_8] : memref<1x128xf32, #tpu.memory_space<vmem>>, vector<1x128xf32>
    %23 = vector.broadcast %22 : vector<1x128xf32> to vector<16x128xf32>
    %24 = arith.addf %21, %23 : vector<16x128xf32>
    %25 = arith.truncf %24 : vector<16x128xf32> to vector<16x128xbf16>
    %c0_9 = arith.constant 0 : index
    %c0_10 = arith.constant 0 : index
    %26 = vector.load %arg5[%c0_9, %c0_10] : memref<128x256xbf16, #tpu.memory_space<vmem>>, vector<128x256xbf16>
    %cst_11 = arith.constant dense<0.000000e+00> : vector<16x256xf32>
    %27 = tpu.matmul %25, %26, %cst_11 {dimension_numbers = #tpu.dot_dimension_numbers<[1], [0], [0], [1], [0, 0, 1, 1], [], []>} : vector<16x128xbf16>, vector<128x256xbf16>, vector<16x256xf32> -> vector<16x256xf32>
    %c0_12 = arith.constant 0 : index
    %c0_13 = arith.constant 0 : index
    %28 = vector.load %arg6[%c0_12, %c0_13] : memref<1x256xf32, #tpu.memory_space<vmem>>, vector<1x256xf32>
    %29 = vector.broadcast %28 : vector<1x256xf32> to vector<16x256xf32>
    %30 = arith.addf %27, %29 : vector<16x256xf32>
    %cst_14 = arith.constant 0.000000e+00 : f32
    %31 = vector.broadcast %cst_14 : f32 to vector<16x256xf32>
    %32 = arith.maximumf %30, %31 : vector<16x256xf32>
    %33 = arith.truncf %32 : vector<16x256xf32> to vector<16x256xbf16>
    %c0_15 = arith.constant 0 : index
    %c0_16 = arith.constant 0 : index
    %34 = vector.load %arg7[%c0_15, %c0_16] : memref<16x256xbf16, #tpu.memory_space<vmem>>, vector<16x256xbf16>
    tpu.vector_store %arg7[%c0_15, %c0_16], %33 {strides = array<i32>} : memref<16x256xbf16, #tpu.memory_space<vmem>>, vector<16x256xbf16>,
    return
  }
  func.func @transform_0(%arg0: i32, %arg1: i32) -> (i32, i32) {
    %c0_i32 = arith.constant 0 : i32
    %c0_i32_0 = arith.constant 0 : i32
    return %arg1, %c0_i32 : i32, i32
  }
  func.func @transform_1(%arg0: i32, %arg1: i32) -> (i32, i32) {
    %c0_i32 = arith.constant 0 : i32
    %c0_i32_0 = arith.constant 0 : i32
    %c0_i32_1 = arith.constant 0 : i32
    return %c0_i32, %c0_i32_0 : i32, i32
  }
  func.func @transform_2(%arg0: i32, %arg1: i32) -> (i32, i32) {
    %c0_i32 = arith.constant 0 : i32
    %c0_i32_0 = arith.constant 0 : i32
    %c0_i32_1 = arith.constant 0 : i32
    return %c0_i32, %c0_i32_0 : i32, i32
  }
  func.func @transform_3(%arg0: i32, %arg1: i32) -> (i32, i32) {
    %c0_i32 = arith.constant 0 : i32
    %c0_i32_0 = arith.constant 0 : i32
    return %c0_i32, %arg0 : i32, i32
  }
  func.func @transform_4(%arg0: i32, %arg1: i32) -> (i32, i32) {
    %c0_i32 = arith.constant 0 : i32
    %c0_i32_0 = arith.constant 0 : i32
    return %c0_i32, %arg0 : i32, i32
  }
  func.func @transform_5(%arg0: i32, %arg1: i32) -> (i32, i32) {
    %c0_i32 = arith.constant 0 : i32
    return %arg1, %arg0 : i32, i32
  }
}

module attributes {stable_mosaic.version = 11 : i64} {
  func.func @_ln_matmul_kernel(%arg0: i32, %arg1: i32, %arg2: memref<16x128xbf16, #tpu.memory_space<vmem>>, %arg3: memref<1x128xf32, #tpu.memory_space<vmem>>, %arg4: memref<1x128xf32, #tpu.memory_space<vmem>>, %arg5: memref<128x128xbf16, #tpu.memory_space<vmem>>, %arg6: memref<1x128xf32, #tpu.memory_space<vmem>>, %arg7: memref<16x128xf32, #tpu.memory_space<vmem>>, %arg8: memref<16x128xf32, #tpu.memory_space<vmem>>) attributes {dimension_semantics = [#tpu.dimension_semantics<parallel>, #tpu.dimension_semantics<parallel>], iteration_bounds = array<i64: 1, 1>, scalar_prefetch = 0 : i64, scratch_operands = 0 : i64, tpu.core_type = #tpu.core_type<tc>, window_params = [{transform_indices = @transform_0, window_bounds = array<i64: 16, 128>}, {pipeline_mode = #tpu.pipeline_mode<synchronous>, transform_indices = @transform_1, window_bounds = array<i64: 1, 128>}, {pipeline_mode = #tpu.pipeline_mode<synchronous>, transform_indices = @transform_2, window_bounds = array<i64: 1, 128>}, {transform_indices = @transform_3, window_bounds = array<i64: 128, 128>}, {transform_indices = @transform_4, window_bounds = array<i64: 1, 128>}, {transform_indices = @transform_5, window_bounds = array<i64: 16, 128>}, {transform_indices = @transform_6, window_bounds = array<i64: 16, 128>}]} {
    %c0 = arith.constant 0 : index
    %c0_0 = arith.constant 0 : index
    %0 = vector.load %arg2[%c0, %c0_0] : memref<16x128xbf16, #tpu.memory_space<vmem>>, vector<16x128xbf16>
    %1 = arith.extf %0 : vector<16x128xbf16> to vector<16x128xf32>
    %cst = arith.constant dense<0.000000e+00> : vector<16xf32>
    %2 = vector.multi_reduction <add>, %1, %cst [1] : vector<16x128xf32> to vector<16xf32>
    %3 = vector.shape_cast %2 : vector<16xf32> to vector<16x1xf32>
    %cst_1 = arith.constant 1.280000e+02 : f32
    %4 = vector.broadcast %cst_1 : f32 to vector<16x1xf32>
    %5 = arith.divf %3, %4 : vector<16x1xf32>
    %6 = vector.broadcast %5 : vector<16x1xf32> to vector<16x128xf32>
    %7 = arith.subf %1, %6 : vector<16x128xf32>
    %8 = arith.mulf %7, %7 : vector<16x128xf32>
    %cst_2 = arith.constant dense<0.000000e+00> : vector<16xf32>
    %9 = vector.multi_reduction <add>, %8, %cst_2 [1] : vector<16x128xf32> to vector<16xf32>
    %10 = vector.shape_cast %9 : vector<16xf32> to vector<16x1xf32>
    %cst_3 = arith.constant 1.280000e+02 : f32
    %11 = vector.broadcast %cst_3 : f32 to vector<16x1xf32>
    %12 = arith.divf %10, %11 : vector<16x1xf32>
    %13 = vector.broadcast %5 : vector<16x1xf32> to vector<16x128xf32>
    %14 = arith.subf %1, %13 : vector<16x128xf32>
    %cst_4 = arith.constant 9.99999974E-6 : f32
    %15 = vector.broadcast %cst_4 : f32 to vector<16x1xf32>
    %16 = arith.addf %12, %15 : vector<16x1xf32>
    %17 = math.rsqrt %16 : vector<16x1xf32>
    %18 = vector.broadcast %17 : vector<16x1xf32> to vector<16x128xf32>
    %19 = arith.mulf %14, %18 : vector<16x128xf32>
    %c0_5 = arith.constant 0 : index
    %c0_6 = arith.constant 0 : index
    %20 = vector.load %arg3[%c0_5, %c0_6] : memref<1x128xf32, #tpu.memory_space<vmem>>, vector<1x128xf32>
    %21 = vector.broadcast %20 : vector<1x128xf32> to vector<16x128xf32>
    %22 = arith.mulf %19, %21 : vector<16x128xf32>
    %c0_7 = arith.constant 0 : index
    %c0_8 = arith.constant 0 : index
    %23 = vector.load %arg4[%c0_7, %c0_8] : memref<1x128xf32, #tpu.memory_space<vmem>>, vector<1x128xf32>
    %24 = vector.broadcast %23 : vector<1x128xf32> to vector<16x128xf32>
    %25 = arith.addf %22, %24 : vector<16x128xf32>
    %26 = arith.truncf %25 : vector<16x128xf32> to vector<16x128xbf16>
    %c0_9 = arith.constant 0 : index
    %c0_10 = arith.constant 0 : index
    %27 = vector.load %arg5[%c0_9, %c0_10] : memref<128x128xbf16, #tpu.memory_space<vmem>>, vector<128x128xbf16>
    %cst_11 = arith.constant dense<0.000000e+00> : vector<16x128xf32>
    %28 = tpu.matmul %26, %27, %cst_11 {dimension_numbers = #tpu.dot_dimension_numbers<[1], [0], [0], [1], [0, 0, 1, 1], [], []>} : vector<16x128xbf16>, vector<128x128xbf16>, vector<16x128xf32> -> vector<16x128xf32>
    %c0_12 = arith.constant 0 : index
    %c0_13 = arith.constant 0 : index
    %29 = vector.load %arg6[%c0_12, %c0_13] : memref<1x128xf32, #tpu.memory_space<vmem>>, vector<1x128xf32>
    %30 = vector.broadcast %29 : vector<1x128xf32> to vector<16x128xf32>
    %31 = arith.addf %28, %30 : vector<16x128xf32>
    %c0_14 = arith.constant 0 : index
    %c0_15 = arith.constant 0 : index
    %32 = vector.load %arg7[%c0_14, %c0_15] : memref<16x128xf32, #tpu.memory_space<vmem>>, vector<16x128xf32>
    %33 = arith.addf %31, %32 : vector<16x128xf32>
    %c0_16 = arith.constant 0 : index
    %c0_17 = arith.constant 0 : index
    %34 = vector.load %arg8[%c0_16, %c0_17] : memref<16x128xf32, #tpu.memory_space<vmem>>, vector<16x128xf32>
    tpu.vector_store %arg8[%c0_16, %c0_17], %33 {strides = array<i32>} : memref<16x128xf32, #tpu.memory_space<vmem>>, vector<16x128xf32>,
    return
  }
  func.func @transform_0(%arg0: i32, %arg1: i32) -> (i32, i32) {
    %c0_i32 = arith.constant 0 : i32
    %c0_i32_0 = arith.constant 0 : i32
    return %arg1, %c0_i32 : i32, i32
  }
  func.func @transform_1(%arg0: i32, %arg1: i32) -> (i32, i32) {
    %c0_i32 = arith.constant 0 : i32
    %c0_i32_0 = arith.constant 0 : i32
    %c0_i32_1 = arith.constant 0 : i32
    return %c0_i32, %c0_i32_0 : i32, i32
  }
  func.func @transform_2(%arg0: i32, %arg1: i32) -> (i32, i32) {
    %c0_i32 = arith.constant 0 : i32
    %c0_i32_0 = arith.constant 0 : i32
    %c0_i32_1 = arith.constant 0 : i32
    return %c0_i32, %c0_i32_0 : i32, i32
  }
  func.func @transform_3(%arg0: i32, %arg1: i32) -> (i32, i32) {
    %c0_i32 = arith.constant 0 : i32
    %c0_i32_0 = arith.constant 0 : i32
    return %c0_i32, %arg0 : i32, i32
  }
  func.func @transform_4(%arg0: i32, %arg1: i32) -> (i32, i32) {
    %c0_i32 = arith.constant 0 : i32
    %c0_i32_0 = arith.constant 0 : i32
    return %c0_i32, %arg0 : i32, i32
  }
  func.func @transform_5(%arg0: i32, %arg1: i32) -> (i32, i32) {
    %c0_i32 = arith.constant 0 : i32
    return %arg1, %arg0 : i32, i32
  }
  func.func @transform_6(%arg0: i32, %arg1: i32) -> (i32, i32) {
    %c0_i32 = arith.constant 0 : i32
    return %arg1, %arg0 : i32, i32
  }
}

</mosaic_0001>

<llo_original>
// kernel: _lambda_.7
$region0: #{_lambda_.7}
  #allocation0 [shape = 'u32[]', space=smem, size = 0x4, offset = 0x4, fixed_abs, tag = 'smem constant byte address 0x4 - core index']
  #allocation1 [shape = 'u32[72,128]{1,0:T(1,128)}', space=vmem, size = 0x9000, scoped, tag = 'internal scratch']
  %s0 = inlined_call_operand.vmem [shape: bf16[2,32,16], index: 0, kind: input, shape index: {}]
  %s1 = inlined_call_operand.vmem [shape: bf16[2,32,16], index: 1, kind: input, shape index: {}]
  %s2 = inlined_call_operand.vmem [shape: bf16[2,32,16], index: 2, kind: input, shape index: {}]
  %s3 = inlined_call_operand.vmem [shape: f32[2,32,16], index: 3, kind: output, shape index: {}]
  %s4 = sld [smem:[#allocation0]]
  $region22: #{_lambda_.7} parent=0
    _
  %s6 = ssub.s32 1, %s4
  %s7 = scalar_select 0, %s6, %s4
  // Predicated region
  $region2: #{_lambda_.7} parent=0 // pred_check
    _
  $region3: #{_lambda_.7} parent=0 // pred_check_branch
    %9 = sbr.rel (0) target = $region5
  $region4: #{_lambda_.7} parent=0 // pred_region
    _
  $region5: #{_lambda_.7} parent=0 // pred_fallthru
    _
  // Predicated region
  $region6: #{_lambda_.7} parent=0 // pred_check
    _
  $region7: #{_lambda_.7} parent=0 // pred_check_branch
    %11 = sbr.rel (0) target = $region9
  $region8: #{_lambda_.7} parent=0 // pred_region
    _
  $region9: #{_lambda_.7} parent=0 // pred_fallthru
    _
  // Predicated region
  $region10: #{_lambda_.7} parent=0 // pred_check
    _
  $region11: #{_lambda_.7} parent=0 // pred_check_branch
    %13 = sbr.rel (0) target = $region13
  $region12: #{_lambda_.7} parent=0 // pred_region
    _
  $region13: #{_lambda_.7} parent=0 // pred_fallthru
    _
  %v14 = vld [vmem:[%s0] sm:$0xf]
  %v15 = vld [vmem:[%s0 + $0x4] sm:$0xf]
  %v16 = vld [vmem:[%s0 + $0x8] sm:$0xf]
  %v17 = vld [vmem:[%s0 + $0xc] sm:$0xf]
  %v18 = vld [vmem:[%s0 + $0x10] sm:$0xf]
  %v19 = vld [vmem:[%s0 + $0x14] sm:$0xf]
  %v20 = vld [vmem:[%s0 + $0x18] sm:$0xf]
  %v21 = vld [vmem:[%s0 + $0x1c] sm:$0xf]
  %v22 = vunpack.c.l.bf16 %v14
  %v23 = vunpack.c.l.bf16 %v15
  %v24 = vunpack.c.l.bf16 %v16
  %v25 = vunpack.c.l.bf16 %v17
  %v26 = vunpack.c.l.bf16 %v18
  %v27 = vunpack.c.l.bf16 %v19
  %v28 = vunpack.c.l.bf16 %v20
  %v29 = vunpack.c.l.bf16 %v21
  %v30 = vld [vmem:[%s1] sm:$0xf]
  %v31 = vld [vmem:[%s1 + $0x4] sm:$0xf]
  %v32 = vld [vmem:[%s1 + $0x8] sm:$0xf]
  %v33 = vld [vmem:[%s1 + $0xc] sm:$0xf]
  %v34 = vld [vmem:[%s1 + $0x10] sm:$0xf]
  %v35 = vld [vmem:[%s1 + $0x14] sm:$0xf]
  %v36 = vld [vmem:[%s1 + $0x18] sm:$0xf]
  %v37 = vld [vmem:[%s1 + $0x1c] sm:$0xf]
  %v38 = vunpack.c.l.bf16 %v30
  %v39 = vunpack.c.l.bf16 %v31
  %v40 = vunpack.c.l.bf16 %v32
  %v41 = vunpack.c.l.bf16 %v33
  %v42 = vunpack.c.l.bf16 %v34
  %v43 = vunpack.c.l.bf16 %v35
  %v44 = vunpack.c.l.bf16 %v36
  %v45 = vunpack.c.l.bf16 %v37
  %v46 = vld [vmem:[%s2] sm:$0xf]
  %v47 = vld [vmem:[%s2 + $0x4] sm:$0xf]
  %v48 = vld [vmem:[%s2 + $0x8] sm:$0xf]
  %v49 = vld [vmem:[%s2 + $0xc] sm:$0xf]
  %v50 = vld [vmem:[%s2 + $0x10] sm:$0xf]
  %v51 = vld [vmem:[%s2 + $0x14] sm:$0xf]
  %v52 = vld [vmem:[%s2 + $0x18] sm:$0xf]
  %v53 = vld [vmem:[%s2 + $0x1c] sm:$0xf]
  %v54 = vunpack.c.l.bf16 %v46
  %v55 = vunpack.c.l.bf16 %v47
  %v56 = vunpack.c.l.bf16 %v48
  %v57 = vunpack.c.l.bf16 %v49
  %v58 = vunpack.c.l.bf16 %v50
  %v59 = vunpack.c.l.bf16 %v51
  %v60 = vunpack.c.l.bf16 %v52
  %v61 = vunpack.c.l.bf16 %v53
  %v62 = vmul.f32 %v22, %v38
  %v63 = vmul.f32 %v23, %v39
  %v64 = vmul.f32 %v24, %v40
  %v65 = vmul.f32 %v25, %v41
  %vm66 = vcmask 130048
  %v67 = vsel %vm66, %v62, 0.0
  %v68 = vsel %vm66, %v63, 0.0
  %v69 = vadd.f32 %v67, %v68
  %v70 = vsel %vm66, %v64, 0.0
  %v71 = vadd.f32 %v69, %v70
  %v72 = vsel %vm66, %v65, 0.0
  %v73 = vadd.f32 %v71, %v72
  %v74 = vrot.slane %v73, 4
  %v75 = vadd.f32 %v73, %v74
  %v76 = vrot.slane %v75, 2
  %v77 = vadd.f32 %v75, %v76
  %v78 = vrot.slane %v77, 1
  %v79 = vadd.f32 %v77, %v78
  %v80 = vmul.f32 %v79, 0.17677669
  %v81 = vmul.f32 %v22, %v42
  %v82 = vmul.f32 %v23, %v43
  %v83 = vmul.f32 %v24, %v44
  %v84 = vmul.f32 %v25, %v45
  %v85 = vsel %vm66, %v81, 0.0
  %v86 = vsel %vm66, %v82, 0.0
  %v87 = vadd.f32 %v85, %v86
  %v88 = vsel %vm66, %v83, 0.0
  %v89 = vadd.f32 %v87, %v88
  %v90 = vsel %vm66, %v84, 0.0
  %v91 = vadd.f32 %v89, %v90
  %v92 = vrot.slane %v91, 4
  %v93 = vadd.f32 %v91, %v92
  %v94 = vrot.slane %v93, 2
  %v95 = vadd.f32 %v93, %v94
  %v96 = vrot.slane %v95, 1
  %v97 = vadd.f32 %v95, %v96
  %v98 = vmul.f32 %v97, 0.17677669
  %v99 = vmax.f32 %v80, %v98
  %v100 = vsub.f32 %v80, %v99
  %v101 = vmul.f32 %v100, 1.442695
  %v102 = vpow.pop %v101
  %v103 = vsub.f32 %v98, %v99
  %v104 = vmul.f32 %v103, 1.442695
  %v105 = vpow.pop %v104
  %v106 = vadd.f32 %v102, %v105
  %v107 = vrcp.pop %v106
  %v108 = vmul.f32 %v102, %v107
  %v109 = vmul.f32 %v108, %v54
  %v110 = vmul.f32 %v108, %v55
  %v111 = vmul.f32 %v108, %v56
  %v112 = vmul.f32 %v108, %v57
  %v113 = vmul.f32 %v105, %v107
  %v114 = vmul.f32 %v113, %v58
  %v115 = vmul.f32 %v113, %v59
  %v116 = vmul.f32 %v113, %v60
  %v117 = vmul.f32 %v113, %v61
  %v118 = vadd.f32 %v109, %v114
  %v119 = vadd.f32 %v110, %v115
  %v120 = vadd.f32 %v111, %v116
  %v121 = vadd.f32 %v112, %v117
  %122 = vst.msk [vmem:[%s3] sm:$0xff] %vm66, %v118
  %123 = vst.msk [vmem:[%s3 + $0x8] sm:$0xff] %vm66, %v119
  %124 = vst.msk [vmem:[%s3 + $0x10] sm:$0xff] %vm66, %v120
  %125 = vst.msk [vmem:[%s3 + $0x18] sm:$0xff] %vm66, %v121
  %v126 = vmul.f32 %v26, %v38
  %v127 = vmul.f32 %v27, %v39
  %v128 = vmul.f32 %v28, %v40
  %v129 = vmul.f32 %v29, %v41
  %v130 = vsel %vm66, %v126, 0.0
  %v131 = vsel %vm66, %v127, 0.0
  %v132 = vadd.f32 %v130, %v131
  %v133 = vsel %vm66, %v128, 0.0
  %v134 = vadd.f32 %v132, %v133
  %v135 = vsel %vm66, %v129, 0.0
  %v136 = vadd.f32 %v134, %v135
  %v137 = vrot.slane %v136, 4
  %v138 = vadd.f32 %v136, %v137
  %v139 = vrot.slane %v138, 2
  %v140 = vadd.f32 %v138, %v139
  %v141 = vrot.slane %v140, 1
  %v142 = vadd.f32 %v140, %v141
  %v143 = vmul.f32 %v142, 0.17677669
  %v144 = vmul.f32 %v26, %v42
  %v145 = vmul.f32 %v27, %v43
  %v146 = vmul.f32 %v28, %v44
  %v147 = vmul.f32 %v29, %v45
  %v148 = vsel %vm66, %v144, 0.0
  %v149 = vsel %vm66, %v145, 0.0
  %v150 = vadd.f32 %v148, %v149
  %v151 = vsel %vm66, %v146, 0.0
  %v152 = vadd.f32 %v150, %v151
  %v153 = vsel %vm66, %v147, 0.0
  %v154 = vadd.f32 %v152, %v153
  %v155 = vrot.slane %v154, 4
  %v156 = vadd.f32 %v154, %v155
  %v157 = vrot.slane %v156, 2
  %v158 = vadd.f32 %v156, %v157
  %v159 = vrot.slane %v158, 1
  %v160 = vadd.f32 %v158, %v159
  %v161 = vmul.f32 %v160, 0.17677669
  %v162 = vmax.f32 %v143, %v161
  %v163 = vsub.f32 %v143, %v162
  %v164 = vmul.f32 %v163, 1.442695
  %v165 = vpow.pop %v164
  %v166 = vsub.f32 %v161, %v162
  %v167 = vmul.f32 %v166, 1.442695
  %v168 = vpow.pop %v167
  %v169 = vadd.f32 %v165, %v168
  %v170 = vrcp.pop %v169
  %v171 = vmul.f32 %v165, %v170
  %v172 = vmul.f32 %v171, %v54
  %v173 = vmul.f32 %v171, %v55
  %v174 = vmul.f32 %v171, %v56
  %v175 = vmul.f32 %v171, %v57
  %v176 = vmul.f32 %v168, %v170
  %v177 = vmul.f32 %v176, %v58
  %v178 = vmul.f32 %v176, %v59
  %v179 = vmul.f32 %v176, %v60
  %v180 = vmul.f32 %v176, %v61
  %v181 = vadd.f32 %v172, %v177
  %v182 = vadd.f32 %v173, %v178
  %v183 = vadd.f32 %v174, %v179
  %v184 = vadd.f32 %v175, %v180
  %s185 = scalar_lea.vmem %s3, 32
  %186 = vst.msk [vmem:[%s185] sm:$0xff] %vm66, %v181
  %187 = vst.msk [vmem:[%s185 + $0x8] sm:$0xff] %vm66, %v182
  %188 = vst.msk [vmem:[%s185 + $0x10] sm:$0xff] %vm66, %v183
  %189 = vst.msk [vmem:[%s185 + $0x18] sm:$0xff] %vm66, %v184
  // Predicated region
  $region14: #{_lambda_.7} parent=0 // pred_check
    _
  $region15: #{_lambda_.7} parent=0 // pred_check_branch
    %191 = sbr.rel (0) target = $region17
  $region16: #{_lambda_.7} parent=0 // pred_region
    _
  $region17: #{_lambda_.7} parent=0 // pred_fallthru
    _
  // Predicated region
  $region18: #{_lambda_.7} parent=0 // pred_check
    _
  $region19: #{_lambda_.7} parent=0 // pred_check_branch
    %193 = sbr.rel (0) target = $region21
  $region20: #{_lambda_.7} parent=0 // pred_region
    _
  $region21: #{_lambda_.7} parent=0 // pred_fallthru
    _

// kernel: _lambda_.6
$region0: #{_lambda_.6}
  #allocation0 [shape = 'u32[]', space=smem, size = 0x4, offset = 0x4, fixed_abs, tag = 'smem constant byte address 0x4 - core index']
  #allocation1 [shape = 'u32[72,128]{1,0:T(1,128)}', space=vmem, size = 0x9000, scoped, tag = 'internal scratch']
  %s0 = inlined_call_operand.vmem [shape: f32[16,128], index: 0, kind: input, shape index: {}]
  %s1 = inlined_call_operand.vmem [shape: f32[1,128], index: 1, kind: input, shape index: {}]
  %s2 = inlined_call_operand.vmem [shape: f32[1,128], index: 2, kind: input, shape index: {}]
  %s3 = inlined_call_operand.hbm [shape: bf16[128,128], index: 3, kind: input, shape index: {}]
  %s4 = inlined_call_operand.hbm [shape: bf16[128,128], index: 4, kind: input, shape index: {}]
  %s5 = inlined_call_operand.hbm [shape: bf16[128,128], index: 5, kind: input, shape index: {}]
  %s6 = inlined_call_operand.vmem [shape: f32[1,128], index: 6, kind: input, shape index: {}]
  %s7 = inlined_call_operand.vmem [shape: f32[1,128], index: 7, kind: input, shape index: {}]
  %s8 = inlined_call_operand.vmem [shape: f32[1,128], index: 8, kind: input, shape index: {}]
  %s9 = inlined_call_operand.vmem [shape: bf16[16,128], index: 9, kind: output, shape index: {0}]
  %s10 = inlined_call_operand.vmem [shape: bf16[16,128], index: 10, kind: output, shape index: {1}]
  %s11 = inlined_call_operand.vmem [shape: bf16[16,128], index: 11, kind: output, shape index: {2}]
  %12 = xla_tuple %s9, %s10, %s11
  %s13 = sld [smem:[#allocation0]]
  $region74: #{_lambda_.6} parent=0
    _
  %s15 = ssub.s32 1, %s13
  %s16 = scalar_select 0, %s15, %s13
  $region1: #{_lambda_.6} parent=0
    #allocation2 [shape = 'u8[32768]{0}', space=vmem, size = 0x8000, scoped, tag = 'input window, operand 3, single buffered']
    #allocation3 [shape = 's32[1]{0}', space=sflag, size = 0x4, scoped, tag = 'scoped memory for _lambda_.6']
    #allocation4 [shape = 'u8[32768]{0}', space=vmem, size = 0x8000, scoped, tag = 'input window, operand 4, single buffered']
    #allocation5 [shape = 's32[1]{0}', space=sflag, size = 0x4, scoped, tag = 'scoped memory for _lambda_.6']
    #allocation6 [shape = 'u8[32768]{0}', space=vmem, size = 0x8000, scoped, tag = 'input window, operand 5, single buffered']
    %17 = vsyncpa [#allocation3], 0
    %18 = vsyncpa [#allocation5], 0
    // Predicated region
    $region2: #{_lambda_.6} parent=1 // pred_check
      _
    $region3: #{_lambda_.6} parent=1 // pred_check_branch
      %20 = sbr.rel (0) target = $region5
    $region4: #{_lambda_.6} parent=1 // pred_region
      _
    $region5: #{_lambda_.6} parent=1 // pred_fallthru
      _
    // Predicated region
    $region6: #{_lambda_.6} parent=1 // pred_check
      _
    $region7: #{_lambda_.6} parent=1 // pred_check_branch
      %22 = sbr.rel (0) target = $region9
    $region8: #{_lambda_.6} parent=1 // pred_region
      _
    $region9: #{_lambda_.6} parent=1 // pred_fallthru
      _
    // Predicated region
    $region10: #{_lambda_.6} parent=1 // pred_check
      _
    $region11: #{_lambda_.6} parent=1 // pred_check_branch
      %24 = sbr.rel (0) target = $region13
    $region12: #{_lambda_.6} parent=1 // pred_region
      _
    $region13: #{_lambda_.6} parent=1 // pred_fallthru
      _
    // Predicated region
    $region14: #{_lambda_.6} parent=1 // pred_check
      _
    $region15: #{_lambda_.6} parent=1 // pred_check_branch
      %26 = sbr.rel (0) target = $region17
    $region16: #{_lambda_.6} parent=1 // pred_region
      %28 = vsyncadd [#allocation3], 0
      %s29 = sshll.u32 %s3, 4
      %s30 = int_to_ptr.hbm [resolvable:$true] %s29
      %s31 = sshll.u32 [#allocation2], 4
      %s32 = int_to_ptr.vmem [resolvable:$true] %s31
      %37 = dma.hbm_to_vmem [thread:$0]  %s30, 1024, %s32, [#allocation3], 64, 64, 4
    $region17: #{_lambda_.6} parent=1 // pred_fallthru
      _
    // Predicated region
    $region18: #{_lambda_.6} parent=1 // pred_check
      _
    $region19: #{_lambda_.6} parent=1 // pred_check_branch
      %39 = sbr.rel (0) target = $region21
    $region20: #{_lambda_.6} parent=1 // pred_region
      %41 = vsyncadd [#allocation5], 0
      %s42 = sshll.u32 %s4, 4
      %s43 = int_to_ptr.hbm [resolvable:$true] %s42
      %s44 = sshll.u32 [#allocation4], 4
      %s45 = int_to_ptr.vmem [resolvable:$true] %s44
      %50 = dma.hbm_to_vmem [thread:$0]  %s43, 1024, %s45, [#allocation5], 64, 64, 4
    $region21: #{_lambda_.6} parent=1 // pred_fallthru
      _
    // Predicated region
    $region22: #{_lambda_.6} parent=1 // pred_check
      _
    $region23: #{_lambda_.6} parent=1 // pred_check_branch
      %52 = sbr.rel (0) target = $region25
    $region24: #{_lambda_.6} parent=1 // pred_region
      %54 = vsyncadd [#allocation5], 0
      %s55 = sshll.u32 %s5, 4
      %s56 = int_to_ptr.hbm [resolvable:$true] %s55
      %s57 = sshll.u32 [#allocation6], 4
      %s58 = int_to_ptr.vmem [resolvable:$true] %s57
      %63 = dma.hbm_to_vmem [thread:$0]  %s56, 1024, %s58, [#allocation5], 64, 64, 4
    $region25: #{_lambda_.6} parent=1 // pred_fallthru
      _
    // Predicated region
    $region26: #{_lambda_.6} parent=1 // pred_check
      _
    $region27: #{_lambda_.6} parent=1 // pred_check_branch
      %65 = sbr.rel (0) target = $region29
    $region28: #{_lambda_.6} parent=1 // pred_region
      _
    $region29: #{_lambda_.6} parent=1 // pred_fallthru
      _
    // Predicated region
    $region30: #{_lambda_.6} parent=1 // pred_check
      _
    $region31: #{_lambda_.6} parent=1 // pred_check_branch
      %67 = sbr.rel (0) target = $region33
    $region32: #{_lambda_.6} parent=1 // pred_region
      _
    $region33: #{_lambda_.6} parent=1 // pred_fallthru
      _
    // Predicated region
    $region34: #{_lambda_.6} parent=1 // pred_check
      _
    $region35: #{_lambda_.6} parent=1 // pred_check_branch
      %69 = sbr.rel (0) target = $region37
    $region36: #{_lambda_.6} parent=1 // pred_region
      _
    $region37: #{_lambda_.6} parent=1 // pred_fallthru
      _
    // Predicated region
    $region38: #{_lambda_.6} parent=1 // pred_check
      _
    $region39: #{_lambda_.6} parent=1 // pred_check_branch
      %71 = sbr.rel (0) target = $region41
    $region40: #{_lambda_.6} parent=1 // pred_region
      %73 = dma.done [#allocation3], 1024
    $region41: #{_lambda_.6} parent=1 // pred_fallthru
      _
    // Predicated region
    $region42: #{_lambda_.6} parent=1 // pred_check
      _
    $region43: #{_lambda_.6} parent=1 // pred_check_branch
      %75 = sbr.rel (0) target = $region45
    $region44: #{_lambda_.6} parent=1 // pred_region
      %77 = dma.done [#allocation5], 1024
    $region45: #{_lambda_.6} parent=1 // pred_fallthru
      _
    // Predicated region
    $region46: #{_lambda_.6} parent=1 // pred_check
      _
    $region47: #{_lambda_.6} parent=1 // pred_check_branch
      %79 = sbr.rel (0) target = $region49
    $region48: #{_lambda_.6} parent=1 // pred_region
      %81 = dma.done [#allocation5], 1024
    $region49: #{_lambda_.6} parent=1 // pred_fallthru
      _
    %v82 = vld [vmem:[%s0] sm:$0xff]
    %v83 = vld [vmem:[%s0 + $0x8] sm:$0xff]
    %84 = vadd.xlane.f32.xlu0 %v82
    %v85 = vpop.xlane.xlu0 %84
    %86 = vadd.xlane.f32.xlu0 %v83
    %v87 = vpop.xlane.xlu0 %86
    %v88 = vrcp.pop 128.0
    %v89 = vmul.f32 128.0, %v88
    %v90 = vsub.f32 1.0, %v89
    %v91 = vmul.f32 %v88, %v90
    %v92 = vadd.f32 %v88, %v91
    %vm93 = vweird.f32 %v88
    %v94 = vsel %vm93, %v88, %v92
    %v95 = vmul.f32 %v85, %v94
    %v96 = vmul.f32 %v87, %v94
    %v97 = vsub.f32 %v82, %v95
    %v98 = vsub.f32 %v83, %v96
    %v99 = vmul.f32 %v97, %v97
    %v100 = vmul.f32 %v98, %v98
    %101 = vadd.xlane.f32.xlu0 %v99
    %v102 = vpop.xlane.xlu0 %101
    %103 = vadd.xlane.f32.xlu0 %v100
    %v104 = vpop.xlane.xlu0 %103
    %v105 = vmul.f32 %v102, %v94
    %v106 = vmul.f32 %v104, %v94
    %v107 = vadd.f32 %v105, 1e-05
    %v108 = vadd.f32 %v106, 1e-05
    %v109 = vrsqrt.pop %v107
    %v110 = vmul.f32 %v109, %v107
    %v111 = vmul.f32 %v110, %v109
    %v112 = vmul.f32 0.5, %v111
    %v113 = vsub.f32 1.5, %v112
    %v114 = vmul.f32 %v109, %v113
    %vm115 = vweird.f32 %v107
    %vm116 = vweird.f32 %v109
    %vm117 = vmor %vm115, %vm116
    %v118 = vsel %vm117, %v109, %v114
    %v119 = vrsqrt.pop %v108
    %v120 = vmul.f32 %v119, %v108
    %v121 = vmul.f32 %v120, %v119
    %v122 = vmul.f32 0.5, %v121
    %v123 = vsub.f32 1.5, %v122
    %v124 = vmul.f32 %v119, %v123
    %vm125 = vweird.f32 %v108
    %vm126 = vweird.f32 %v119
    %vm127 = vmor %vm125, %vm126
    %v128 = vsel %vm127, %v119, %v124
    %v129 = vmul.f32 %v97, %v118
    %v130 = vmul.f32 %v98, %v128
    %v131 = vld [vmem:[%s1] sm:$0x1]
    %v133 = vperm.slane %v131, 0
    %v135 = vmul.f32 %v129, %v133
    %v136 = vmul.f32 %v130, %v133
    %v137 = vld [vmem:[%s2] sm:$0x1]
    %v139 = vperm.slane %v137, 0
    %v141 = vadd.f32 %v135, %v139
    %v142 = vadd.f32 %v136, %v139
    %v143 = vpack.c.bf16 %v142, %v141
    %v144 = vld [vmem:[#allocation2] sm:$0xf]
    %v145 = vld [vmem:[#allocation2 + $0x4] sm:$0xf]
    %v146 = vld [vmem:[#allocation2 + $0x8] sm:$0xf]
    %v147 = vld [vmem:[#allocation2 + $0xc] sm:$0xf]
    %v148 = vld [vmem:[#allocation2 + $0x10] sm:$0xf]
    %v149 = vld [vmem:[#allocation2 + $0x14] sm:$0xf]
    %v150 = vld [vmem:[#allocation2 + $0x18] sm:$0xf]
    %v151 = vld [vmem:[#allocation2 + $0x1c] sm:$0xf]
    %v152 = vld [vmem:[#allocation2 + $0x20] sm:$0xf]
    %v153 = vld [vmem:[#allocation2 + $0x24] sm:$0xf]
    %v154 = vld [vmem:[#allocation2 + $0x28] sm:$0xf]
    %v155 = vld [vmem:[#allocation2 + $0x2c] sm:$0xf]
    %v156 = vld [vmem:[#allocation2 + $0x30] sm:$0xf]
    %v157 = vld [vmem:[#allocation2 + $0x34] sm:$0xf]
    %v158 = vld [vmem:[#allocation2 + $0x38] sm:$0xf]
    %v159 = vld [vmem:[#allocation2 + $0x3c] sm:$0xf]
    %v160 = vld [vmem:[%s6] sm:$0x1]
    %v162 = vperm.slane %v160, 0
    %v180 = vunpack.c.l.b16 %v144
    %v181 = vunpack.c.l.b16 %v145
    %v182 = vunpack.c.l.b16 %v146
    %v183 = vunpack.c.l.b16 %v147
    %v184 = vunpack.c.l.b16 %v148
    %v185 = vunpack.c.l.b16 %v149
    %v186 = vunpack.c.l.b16 %v150
    %v187 = vunpack.c.l.b16 %v151
    %v188 = vunpack.c.l.b16 %v152
    %v189 = vunpack.c.l.b16 %v153
    %v190 = vunpack.c.l.b16 %v154
    %v191 = vunpack.c.l.b16 %v155
    %v192 = vunpack.c.l.b16 %v156
    %v193 = vunpack.c.l.b16 %v157
    %v194 = vunpack.c.l.b16 %v158
    %v195 = vunpack.c.l.b16 %v159
    %v196 = vpack.c.b16 %v181, %v180
    %v197 = vpack.c.b16 %v183, %v182
    %v198 = vpack.c.b16 %v185, %v184
    %v199 = vpack.c.b16 %v187, %v186
    %v200 = vpack.c.b16 %v189, %v188
    %v201 = vpack.c.b16 %v191, %v190
    %v202 = vpack.c.b16 %v193, %v192
    %v203 = vpack.c.b16 %v195, %v194
    %212 = vmatpush.bf16.msra.mxu0 %v203
    %213 = vmatpush.bf16.msra.mxu0 %v202
    %214 = vmatpush.bf16.msra.mxu0 %v201
    %215 = vmatpush.bf16.msra.mxu0 %v200
    %216 = vmatpush.bf16.msra.mxu0 %v199
    %217 = vmatpush.bf16.msra.mxu0 %v198
    %218 = vmatpush.bf16.msra.mxu0 %v197
    %219 = vmatpush.bf16.msra.mxu0 %v196
    %220 = vmatmul.bf16.gmra.mxu0 %v143
    %v221 = vpop.f32.mrf.mxu0
    %v222 = vadd.f32 %v162, %v221
    %v223 = vpop.f32.mrf.mxu0
    %v224 = vadd.f32 %v162, %v223
    %225 = vdwg.mxu0
    %v226 = vpack.c.bf16 %v222, %v222
    %v227 = vpack.c.bf16 %v224, %v224
    %228 = vst [vmem:[%s9] sm:$0xf] %v226
    %229 = vst [vmem:[%s9 + $0x4] sm:$0xf] %v227
    %v230 = vld [vmem:[#allocation4] sm:$0xf]
    %v231 = vld [vmem:[#allocation4 + $0x4] sm:$0xf]
    %v232 = vld [vmem:[#allocation4 + $0x8] sm:$0xf]
    %v233 = vld [vmem:[#allocation4 + $0xc] sm:$0xf]
    %v234 = vld [vmem:[#allocation4 + $0x10] sm:$0xf]
    %v235 = vld [vmem:[#allocation4 + $0x14] sm:$0xf]
    %v236 = vld [vmem:[#allocation4 + $0x18] sm:$0xf]
    %v237 = vld [vmem:[#allocation4 + $0x1c] sm:$0xf]
    %v238 = vld [vmem:[#allocation4 + $0x20] sm:$0xf]
    %v239 = vld [vmem:[#allocation4 + $0x24] sm:$0xf]
    %v240 = vld [vmem:[#allocation4 + $0x28] sm:$0xf]
    %v241 = vld [vmem:[#allocation4 + $0x2c] sm:$0xf]
    %v242 = vld [vmem:[#allocation4 + $0x30] sm:$0xf]
    %v243 = vld [vmem:[#allocation4 + $0x34] sm:$0xf]
    %v244 = vld [vmem:[#allocation4 + $0x38] sm:$0xf]
    %v245 = vld [vmem:[#allocation4 + $0x3c] sm:$0xf]
    %v246 = vld [vmem:[%s7] sm:$0x1]
    %v248 = vperm.slane %v246, 0
    %v266 = vunpack.c.l.b16 %v230
    %v267 = vunpack.c.l.b16 %v231
    %v268 = vunpack.c.l.b16 %v232
    %v269 = vunpack.c.l.b16 %v233
    %v270 = vunpack.c.l.b16 %v234
    %v271 = vunpack.c.l.b16 %v235
    %v272 = vunpack.c.l.b16 %v236
    %v273 = vunpack.c.l.b16 %v237
    %v274 = vunpack.c.l.b16 %v238
    %v275 = vunpack.c.l.b16 %v239
    %v276 = vunpack.c.l.b16 %v240
    %v277 = vunpack.c.l.b16 %v241
    %v278 = vunpack.c.l.b16 %v242
    %v279 = vunpack.c.l.b16 %v243
    %v280 = vunpack.c.l.b16 %v244
    %v281 = vunpack.c.l.b16 %v245
    %v282 = vpack.c.b16 %v267, %v266
    %v283 = vpack.c.b16 %v269, %v268
    %v284 = vpack.c.b16 %v271, %v270
    %v285 = vpack.c.b16 %v273, %v272
    %v286 = vpack.c.b16 %v275, %v274
    %v287 = vpack.c.b16 %v277, %v276
    %v288 = vpack.c.b16 %v279, %v278
    %v289 = vpack.c.b16 %v281, %v280
    %298 = vmatpush.bf16.msra.mxu0 %v289
    %299 = vmatpush.bf16.msra.mxu0 %v288
    %300 = vmatpush.bf16.msra.mxu0 %v287
    %301 = vmatpush.bf16.msra.mxu0 %v286
    %302 = vmatpush.bf16.msra.mxu0 %v285
    %303 = vmatpush.bf16.msra.mxu0 %v284
    %304 = vmatpush.bf16.msra.mxu0 %v283
    %305 = vmatpush.bf16.msra.mxu0 %v282
    %306 = vmatmul.bf16.gmra.mxu0 %v143
    %v307 = vpop.f32.mrf.mxu0
    %v308 = vadd.f32 %v248, %v307
    %v309 = vpop.f32.mrf.mxu0
    %v310 = vadd.f32 %v248, %v309
    %311 = vdwg.mxu0
    %v312 = vpack.c.bf16 %v308, %v308
    %v313 = vpack.c.bf16 %v310, %v310
    %314 = vst [vmem:[%s10] sm:$0xf] %v312
    %315 = vst [vmem:[%s10 + $0x4] sm:$0xf] %v313
    %v316 = vld [vmem:[#allocation6] sm:$0xf]
    %v317 = vld [vmem:[#allocation6 + $0x4] sm:$0xf]
    %v318 = vld [vmem:[#allocation6 + $0x8] sm:$0xf]
    %v319 = vld [vmem:[#allocation6 + $0xc] sm:$0xf]
    %v320 = vld [vmem:[#allocation6 + $0x10] sm:$0xf]
    %v321 = vld [vmem:[#allocation6 + $0x14] sm:$0xf]
    %v322 = vld [vmem:[#allocation6 + $0x18] sm:$0xf]
    %v323 = vld [vmem:[#allocation6 + $0x1c] sm:$0xf]
    %v324 = vld [vmem:[#allocation6 + $0x20] sm:$0xf]
    %v325 = vld [vmem:[#allocation6 + $0x24] sm:$0xf]
    %v326 = vld [vmem:[#allocation6 + $0x28] sm:$0xf]
    %v327 = vld [vmem:[#allocation6 + $0x2c] sm:$0xf]
    %v328 = vld [vmem:[#allocation6 + $0x30] sm:$0xf]
    %v329 = vld [vmem:[#allocation6 + $0x34] sm:$0xf]
    %v330 = vld [vmem:[#allocation6 + $0x38] sm:$0xf]
    %v331 = vld [vmem:[#allocation6 + $0x3c] sm:$0xf]
    %v332 = vld [vmem:[%s8] sm:$0x1]
    %v334 = vperm.slane %v332, 0
    %v352 = vunpack.c.l.b16 %v316
    %v353 = vunpack.c.l.b16 %v317
    %v354 = vunpack.c.l.b16 %v318
    %v355 = vunpack.c.l.b16 %v319
    %v356 = vunpack.c.l.b16 %v320
    %v357 = vunpack.c.l.b16 %v321
    %v358 = vunpack.c.l.b16 %v322
    %v359 = vunpack.c.l.b16 %v323
    %v360 = vunpack.c.l.b16 %v324
    %v361 = vunpack.c.l.b16 %v325
    %v362 = vunpack.c.l.b16 %v326
    %v363 = vunpack.c.l.b16 %v327
    %v364 = vunpack.c.l.b16 %v328
    %v365 = vunpack.c.l.b16 %v329
    %v366 = vunpack.c.l.b16 %v330
    %v367 = vunpack.c.l.b16 %v331
    %v368 = vpack.c.b16 %v353, %v352
    %v369 = vpack.c.b16 %v355, %v354
    %v370 = vpack.c.b16 %v357, %v356
    %v371 = vpack.c.b16 %v359, %v358
    %v372 = vpack.c.b16 %v361, %v360
    %v373 = vpack.c.b16 %v363, %v362
    %v374 = vpack.c.b16 %v365, %v364
    %v375 = vpack.c.b16 %v367, %v366
    %384 = vmatpush.bf16.msra.mxu0 %v375
    %385 = vmatpush.bf16.msra.mxu0 %v374
    %386 = vmatpush.bf16.msra.mxu0 %v373
    %387 = vmatpush.bf16.msra.mxu0 %v372
    %388 = vmatpush.bf16.msra.mxu0 %v371
    %389 = vmatpush.bf16.msra.mxu0 %v370
    %390 = vmatpush.bf16.msra.mxu0 %v369
    %391 = vmatpush.bf16.msra.mxu0 %v368
    %392 = vmatmul.bf16.gmra.mxu0 %v143
    %v393 = vpop.f32.mrf.mxu0
    %v394 = vadd.f32 %v334, %v393
    %v395 = vpop.f32.mrf.mxu0
    %v396 = vadd.f32 %v334, %v395
    %397 = vdwg.mxu0
    %v398 = vpack.c.bf16 %v394, %v394
    %v399 = vpack.c.bf16 %v396, %v396
    %400 = vst [vmem:[%s11] sm:$0xf] %v398
    %401 = vst [vmem:[%s11 + $0x4] sm:$0xf] %v399
    // Predicated region
    $region50: #{_lambda_.6} parent=1 // pred_check
      _
    $region51: #{_lambda_.6} parent=1 // pred_check_branch
      %403 = sbr.rel (0) target = $region53
    $region52: #{_lambda_.6} parent=1 // pred_region
      _
    $region53: #{_lambda_.6} parent=1 // pred_fallthru
      _
    // Predicated region
    $region54: #{_lambda_.6} parent=1 // pred_check
      _
    $region55: #{_lambda_.6} parent=1 // pred_check_branch
      %405 = sbr.rel (0) target = $region57
    $region56: #{_lambda_.6} parent=1 // pred_region
      _
    $region57: #{_lambda_.6} parent=1 // pred_fallthru
      _
    // Predicated region
    $region58: #{_lambda_.6} parent=1 // pred_check
      _
    $region59: #{_lambda_.6} parent=1 // pred_check_branch
      %407 = sbr.rel (0) target = $region61
    $region60: #{_lambda_.6} parent=1 // pred_region
      _
    $region61: #{_lambda_.6} parent=1 // pred_fallthru
      _
    // Predicated region
    $region62: #{_lambda_.6} parent=1 // pred_check
      _
    $region63: #{_lambda_.6} parent=1 // pred_check_branch
      %409 = sbr.rel (0) target = $region65
    $region64: #{_lambda_.6} parent=1 // pred_region
      _
    $region65: #{_lambda_.6} parent=1 // pred_fallthru
      _
    // Predicated region
    $region66: #{_lambda_.6} parent=1 // pred_check
      _
    $region67: #{_lambda_.6} parent=1 // pred_check_branch
      %411 = sbr.rel (0) target = $region69
    $region68: #{_lambda_.6} parent=1 // pred_region
      _
    $region69: #{_lambda_.6} parent=1 // pred_fallthru
      _
    // Predicated region
    $region70: #{_lambda_.6} parent=1 // pred_check
      _
    $region71: #{_lambda_.6} parent=1 // pred_check_branch
      %413 = sbr.rel (0) target = $region73
    $region72: #{_lambda_.6} parent=1 // pred_region
      _
    $region73: #{_lambda_.6} parent=1 // pred_fallthru
      _
    %414 = vsyncpa [#allocation3], 1
    %415 = vsyncpa [#allocation5], 1

// kernel: _lambda_.8
$region0: #{_lambda_.8}
  #allocation0 [shape = 'u32[]', space=smem, size = 0x4, offset = 0x4, fixed_abs, tag = 'smem constant byte address 0x4 - core index']
  #allocation1 [shape = 'u32[72,128]{1,0:T(1,128)}', space=vmem, size = 0x9000, scoped, tag = 'internal scratch']
  %s0 = inlined_call_operand.vmem [shape: bf16[2,32,8], index: 0, kind: input, shape index: {}]
  %s1 = inlined_call_operand.vmem [shape: bf16[2,32,8], index: 1, kind: input, shape index: {}]
  %s2 = inlined_call_operand.vmem [shape: bf16[2,32,8], index: 2, kind: input, shape index: {}]
  %s3 = inlined_call_operand.vmem [shape: f32[2,32,8], index: 3, kind: output, shape index: {}]
  %s4 = sld [smem:[#allocation0]]
  $region22: #{_lambda_.8} parent=0
    _
  %s6 = ssub.s32 1, %s4
  %s7 = scalar_select 0, %s6, %s4
  // Predicated region
  $region2: #{_lambda_.8} parent=0 // pred_check
    _
  $region3: #{_lambda_.8} parent=0 // pred_check_branch
    %9 = sbr.rel (0) target = $region5
  $region4: #{_lambda_.8} parent=0 // pred_region
    _
  $region5: #{_lambda_.8} parent=0 // pred_fallthru
    _
  // Predicated region
  $region6: #{_lambda_.8} parent=0 // pred_check
    _
  $region7: #{_lambda_.8} parent=0 // pred_check_branch
    %11 = sbr.rel (0) target = $region9
  $region8: #{_lambda_.8} parent=0 // pred_region
    _
  $region9: #{_lambda_.8} parent=0 // pred_fallthru
    _
  // Predicated region
  $region10: #{_lambda_.8} parent=0 // pred_check
    _
  $region11: #{_lambda_.8} parent=0 // pred_check_branch
    %13 = sbr.rel (0) target = $region13
  $region12: #{_lambda_.8} parent=0 // pred_region
    _
  $region13: #{_lambda_.8} parent=0 // pred_fallthru
    _
  %v14 = vld [vmem:[%s0] sm:$0xf]
  %v15 = vld [vmem:[%s0 + $0x4] sm:$0xf]
  %v16 = vld [vmem:[%s0 + $0x8] sm:$0xf]
  %v17 = vld [vmem:[%s0 + $0xc] sm:$0xf]
  %v18 = vld [vmem:[%s0 + $0x10] sm:$0xf]
  %v19 = vld [vmem:[%s0 + $0x14] sm:$0xf]
  %v20 = vld [vmem:[%s0 + $0x18] sm:$0xf]
  %v21 = vld [vmem:[%s0 + $0x1c] sm:$0xf]
  %v22 = vunpack.c.l.bf16 %v14
  %v23 = vunpack.c.l.bf16 %v15
  %v24 = vunpack.c.l.bf16 %v16
  %v25 = vunpack.c.l.bf16 %v17
  %v26 = vunpack.c.l.bf16 %v18
  %v27 = vunpack.c.l.bf16 %v19
  %v28 = vunpack.c.l.bf16 %v20
  %v29 = vunpack.c.l.bf16 %v21
  %v30 = vld [vmem:[%s1] sm:$0xf]
  %v31 = vld [vmem:[%s1 + $0x4] sm:$0xf]
  %v32 = vld [vmem:[%s1 + $0x8] sm:$0xf]
  %v33 = vld [vmem:[%s1 + $0xc] sm:$0xf]
  %v34 = vld [vmem:[%s1 + $0x10] sm:$0xf]
  %v35 = vld [vmem:[%s1 + $0x14] sm:$0xf]
  %v36 = vld [vmem:[%s1 + $0x18] sm:$0xf]
  %v37 = vld [vmem:[%s1 + $0x1c] sm:$0xf]
  %v38 = vunpack.c.l.bf16 %v30
  %v39 = vunpack.c.l.bf16 %v31
  %v40 = vunpack.c.l.bf16 %v32
  %v41 = vunpack.c.l.bf16 %v33
  %v42 = vunpack.c.l.bf16 %v34
  %v43 = vunpack.c.l.bf16 %v35
  %v44 = vunpack.c.l.bf16 %v36
  %v45 = vunpack.c.l.bf16 %v37
  %v46 = vld [vmem:[%s2] sm:$0xf]
  %v47 = vld [vmem:[%s2 + $0x4] sm:$0xf]
  %v48 = vld [vmem:[%s2 + $0x8] sm:$0xf]
  %v49 = vld [vmem:[%s2 + $0xc] sm:$0xf]
  %v50 = vld [vmem:[%s2 + $0x10] sm:$0xf]
  %v51 = vld [vmem:[%s2 + $0x14] sm:$0xf]
  %v52 = vld [vmem:[%s2 + $0x18] sm:$0xf]
  %v53 = vld [vmem:[%s2 + $0x1c] sm:$0xf]
  %v54 = vunpack.c.l.bf16 %v46
  %v55 = vunpack.c.l.bf16 %v47
  %v56 = vunpack.c.l.bf16 %v48
  %v57 = vunpack.c.l.bf16 %v49
  %v58 = vunpack.c.l.bf16 %v50
  %v59 = vunpack.c.l.bf16 %v51
  %v60 = vunpack.c.l.bf16 %v52
  %v61 = vunpack.c.l.bf16 %v53
  %v62 = vmul.f32 %v22, %v38
  %v63 = vmul.f32 %v23, %v39
  %v64 = vmul.f32 %v24, %v40
  %v65 = vmul.f32 %v25, %v41
  %vm66 = vcmask 64512
  %v67 = vsel %vm66, %v62, 0.0
  %v68 = vsel %vm66, %v63, 0.0
  %v69 = vadd.f32 %v67, %v68
  %v70 = vsel %vm66, %v64, 0.0
  %v71 = vadd.f32 %v69, %v70
  %v72 = vsel %vm66, %v65, 0.0
  %v73 = vadd.f32 %v71, %v72
  %v74 = vrot.slane %v73, 4
  %v75 = vadd.f32 %v73, %v74
  %v76 = vrot.slane %v75, 2
  %v77 = vadd.f32 %v75, %v76
  %v78 = vrot.slane %v77, 1
  %v79 = vadd.f32 %v77, %v78
  %v80 = vmul.f32 %v79, 0.17677669
  %v81 = vmul.f32 %v22, %v42
  %v82 = vmul.f32 %v23, %v43
  %v83 = vmul.f32 %v24, %v44
  %v84 = vmul.f32 %v25, %v45
  %v85 = vsel %vm66, %v81, 0.0
  %v86 = vsel %vm66, %v82, 0.0
  %v87 = vadd.f32 %v85, %v86
  %v88 = vsel %vm66, %v83, 0.0
  %v89 = vadd.f32 %v87, %v88
  %v90 = vsel %vm66, %v84, 0.0
  %v91 = vadd.f32 %v89, %v90
  %v92 = vrot.slane %v91, 4
  %v93 = vadd.f32 %v91, %v92
  %v94 = vrot.slane %v93, 2
  %v95 = vadd.f32 %v93, %v94
  %v96 = vrot.slane %v95, 1
  %v97 = vadd.f32 %v95, %v96
  %v98 = vmul.f32 %v97, 0.17677669
  %v99 = vmax.f32 %v80, %v98
  %v100 = vsub.f32 %v80, %v99
  %v101 = vmul.f32 %v100, 1.442695
  %v102 = vpow.pop %v101
  %v103 = vsub.f32 %v98, %v99
  %v104 = vmul.f32 %v103, 1.442695
  %v105 = vpow.pop %v104
  %v106 = vadd.f32 %v102, %v105
  %v107 = vrcp.pop %v106
  %v108 = vmul.f32 %v102, %v107
  %v109 = vmul.f32 %v108, %v54
  %v110 = vmul.f32 %v108, %v55
  %v111 = vmul.f32 %v108, %v56
  %v112 = vmul.f32 %v108, %v57
  %v113 = vmul.f32 %v105, %v107
  %v114 = vmul.f32 %v113, %v58
  %v115 = vmul.f32 %v113, %v59
  %v116 = vmul.f32 %v113, %v60
  %v117 = vmul.f32 %v113, %v61
  %v118 = vadd.f32 %v109, %v114
  %v119 = vadd.f32 %v110, %v115
  %v120 = vadd.f32 %v111, %v116
  %v121 = vadd.f32 %v112, %v117
  %122 = vst.msk [vmem:[%s3] sm:$0xff] %vm66, %v118
  %123 = vst.msk [vmem:[%s3 + $0x8] sm:$0xff] %vm66, %v119
  %124 = vst.msk [vmem:[%s3 + $0x10] sm:$0xff] %vm66, %v120
  %125 = vst.msk [vmem:[%s3 + $0x18] sm:$0xff] %vm66, %v121
  %v126 = vmul.f32 %v26, %v38
  %v127 = vmul.f32 %v27, %v39
  %v128 = vmul.f32 %v28, %v40
  %v129 = vmul.f32 %v29, %v41
  %v130 = vsel %vm66, %v126, 0.0
  %v131 = vsel %vm66, %v127, 0.0
  %v132 = vadd.f32 %v130, %v131
  %v133 = vsel %vm66, %v128, 0.0
  %v134 = vadd.f32 %v132, %v133
  %v135 = vsel %vm66, %v129, 0.0
  %v136 = vadd.f32 %v134, %v135
  %v137 = vrot.slane %v136, 4
  %v138 = vadd.f32 %v136, %v137
  %v139 = vrot.slane %v138, 2
  %v140 = vadd.f32 %v138, %v139
  %v141 = vrot.slane %v140, 1
  %v142 = vadd.f32 %v140, %v141
  %v143 = vmul.f32 %v142, 0.17677669
  %v144 = vmul.f32 %v26, %v42
  %v145 = vmul.f32 %v27, %v43
  %v146 = vmul.f32 %v28, %v44
  %v147 = vmul.f32 %v29, %v45
  %v148 = vsel %vm66, %v144, 0.0
  %v149 = vsel %vm66, %v145, 0.0
  %v150 = vadd.f32 %v148, %v149
  %v151 = vsel %vm66, %v146, 0.0
  %v152 = vadd.f32 %v150, %v151
  %v153 = vsel %vm66, %v147, 0.0
  %v154 = vadd.f32 %v152, %v153
  %v155 = vrot.slane %v154, 4
  %v156 = vadd.f32 %v154, %v155
  %v157 = vrot.slane %v156, 2
  %v158 = vadd.f32 %v156, %v157
  %v159 = vrot.slane %v158, 1
  %v160 = vadd.f32 %v158, %v159
  %v161 = vmul.f32 %v160, 0.17677669
  %v162 = vmax.f32 %v143, %v161
  %v163 = vsub.f32 %v143, %v162
  %v164 = vmul.f32 %v163, 1.442695
  %v165 = vpow.pop %v164
  %v166 = vsub.f32 %v161, %v162
  %v167 = vmul.f32 %v166, 1.442695
  %v168 = vpow.pop %v167
  %v169 = vadd.f32 %v165, %v168
  %v170 = vrcp.pop %v169
  %v171 = vmul.f32 %v165, %v170
  %v172 = vmul.f32 %v171, %v54
  %v173 = vmul.f32 %v171, %v55
  %v174 = vmul.f32 %v171, %v56
  %v175 = vmul.f32 %v171, %v57
  %v176 = vmul.f32 %v168, %v170
  %v177 = vmul.f32 %v176, %v58
  %v178 = vmul.f32 %v176, %v59
  %v179 = vmul.f32 %v176, %v60
  %v180 = vmul.f32 %v176, %v61
  %v181 = vadd.f32 %v172, %v177
  %v182 = vadd.f32 %v173, %v178
  %v183 = vadd.f32 %v174, %v179
  %v184 = vadd.f32 %v175, %v180
  %s185 = scalar_lea.vmem %s3, 32
  %186 = vst.msk [vmem:[%s185] sm:$0xff] %vm66, %v181
  %187 = vst.msk [vmem:[%s185 + $0x8] sm:$0xff] %vm66, %v182
  %188 = vst.msk [vmem:[%s185 + $0x10] sm:$0xff] %vm66, %v183
  %189 = vst.msk [vmem:[%s185 + $0x18] sm:$0xff] %vm66, %v184
  // Predicated region
  $region14: #{_lambda_.8} parent=0 // pred_check
    _
  $region15: #{_lambda_.8} parent=0 // pred_check_branch
    %191 = sbr.rel (0) target = $region17
  $region16: #{_lambda_.8} parent=0 // pred_region
    _
  $region17: #{_lambda_.8} parent=0 // pred_fallthru
    _
  // Predicated region
  $region18: #{_lambda_.8} parent=0 // pred_check
    _
  $region19: #{_lambda_.8} parent=0 // pred_check_branch
    %193 = sbr.rel (0) target = $region21
  $region20: #{_lambda_.8} parent=0 // pred_region
    _
  $region21: #{_lambda_.8} parent=0 // pred_fallthru
    _

// kernel: _lambda_.9
$region0: #{_lambda_.9}
  #allocation0 [shape = 'u32[]', space=smem, size = 0x4, offset = 0x4, fixed_abs, tag = 'smem constant byte address 0x4 - core index']
  #allocation1 [shape = 'u32[72,128]{1,0:T(1,128)}', space=vmem, size = 0x9000, scoped, tag = 'internal scratch']
  %s0 = inlined_call_operand.vmem [shape: bf16[16,128], index: 0, kind: input, shape index: {}]
  %s1 = inlined_call_operand.vmem [shape: f32[1,128], index: 1, kind: input, shape index: {}]
  %s2 = inlined_call_operand.vmem [shape: f32[1,128], index: 2, kind: input, shape index: {}]
  %s3 = inlined_call_operand.vmem [shape: bf16[128,128], index: 3, kind: input, shape index: {}]
  %s4 = inlined_call_operand.vmem [shape: f32[1,128], index: 4, kind: input, shape index: {}]
  %s5 = inlined_call_operand.vmem [shape: f32[16,128], index: 5, kind: input, shape index: {}]
  %s6 = inlined_call_operand.vmem [shape: f32[16,128], index: 6, kind: output, shape index: {}]
  %s7 = sld [smem:[#allocation0]]
  $region34: #{_lambda_.9} parent=0
    _
  %s9 = ssub.s32 1, %s7
  %s10 = scalar_select 0, %s9, %s7
  // Predicated region
  $region2: #{_lambda_.9} parent=0 // pred_check
    _
  $region3: #{_lambda_.9} parent=0 // pred_check_branch
    %12 = sbr.rel (0) target = $region5
  $region4: #{_lambda_.9} parent=0 // pred_region
    _
  $region5: #{_lambda_.9} parent=0 // pred_fallthru
    _
  // Predicated region
  $region6: #{_lambda_.9} parent=0 // pred_check
    _
  $region7: #{_lambda_.9} parent=0 // pred_check_branch
    %14 = sbr.rel (0) target = $region9
  $region8: #{_lambda_.9} parent=0 // pred_region
    _
  $region9: #{_lambda_.9} parent=0 // pred_fallthru
    _
  // Predicated region
  $region10: #{_lambda_.9} parent=0 // pred_check
    _
  $region11: #{_lambda_.9} parent=0 // pred_check_branch
    %16 = sbr.rel (0) target = $region13
  $region12: #{_lambda_.9} parent=0 // pred_region
    _
  $region13: #{_lambda_.9} parent=0 // pred_fallthru
    _
  // Predicated region
  $region14: #{_lambda_.9} parent=0 // pred_check
    _
  $region15: #{_lambda_.9} parent=0 // pred_check_branch
    %18 = sbr.rel (0) target = $region17
  $region16: #{_lambda_.9} parent=0 // pred_region
    _
  $region17: #{_lambda_.9} parent=0 // pred_fallthru
    _
  // Predicated region
  $region18: #{_lambda_.9} parent=0 // pred_check
    _
  $region19: #{_lambda_.9} parent=0 // pred_check_branch
    %20 = sbr.rel (0) target = $region21
  $region20: #{_lambda_.9} parent=0 // pred_region
    _
  $region21: #{_lambda_.9} parent=0 // pred_fallthru
    _
  // Predicated region
  $region22: #{_lambda_.9} parent=0 // pred_check
    _
  $region23: #{_lambda_.9} parent=0 // pred_check_branch
    %22 = sbr.rel (0) target = $region25
  $region24: #{_lambda_.9} parent=0 // pred_region
    _
  $region25: #{_lambda_.9} parent=0 // pred_fallthru
    _
  %v23 = vld [vmem:[%s0] sm:$0xf]
  %v24 = vld [vmem:[%s0 + $0x4] sm:$0xf]
  %v25 = vunpack.c.l.bf16 %v23
  %v26 = vunpack.c.l.bf16 %v24
  %27 = vadd.xlane.f32.xlu0 %v25
  %v28 = vpop.xlane.xlu0 %27
  %29 = vadd.xlane.f32.xlu0 %v26
  %v30 = vpop.xlane.xlu0 %29
  %v31 = vrcp.pop 128.0
  %v32 = vmul.f32 128.0, %v31
  %v33 = vsub.f32 1.0, %v32
  %v34 = vmul.f32 %v31, %v33
  %v35 = vadd.f32 %v31, %v34
  %vm36 = vweird.f32 %v31
  %v37 = vsel %vm36, %v31, %v35
  %v38 = vmul.f32 %v28, %v37
  %v39 = vmul.f32 %v30, %v37
  %v40 = vsub.f32 %v25, %v38
  %v41 = vsub.f32 %v26, %v39
  %v42 = vmul.f32 %v40, %v40
  %v43 = vmul.f32 %v41, %v41
  %44 = vadd.xlane.f32.xlu0 %v42
  %v45 = vpop.xlane.xlu0 %44
  %46 = vadd.xlane.f32.xlu0 %v43
  %v47 = vpop.xlane.xlu0 %46
  %v48 = vmul.f32 %v45, %v37
  %v49 = vmul.f32 %v47, %v37
  %v50 = vadd.f32 %v48, 1e-05
  %v51 = vadd.f32 %v49, 1e-05
  %v52 = vrsqrt.pop %v50
  %v53 = vmul.f32 %v52, %v50
  %v54 = vmul.f32 %v53, %v52
  %v55 = vmul.f32 0.5, %v54
  %v56 = vsub.f32 1.5, %v55
  %v57 = vmul.f32 %v52, %v56
  %vm58 = vweird.f32 %v50
  %vm59 = vweird.f32 %v52
  %vm60 = vmor %vm58, %vm59
  %v61 = vsel %vm60, %v52, %v57
  %v62 = vrsqrt.pop %v51
  %v63 = vmul.f32 %v62, %v51
  %v64 = vmul.f32 %v63, %v62
  %v65 = vmul.f32 0.5, %v64
  %v66 = vsub.f32 1.5, %v65
  %v67 = vmul.f32 %v62, %v66
  %vm68 = vweird.f32 %v51
  %vm69 = vweird.f32 %v62
  %vm70 = vmor %vm68, %vm69
  %v71 = vsel %vm70, %v62, %v67
  %v72 = vmul.f32 %v40, %v61
  %v73 = vmul.f32 %v41, %v71
  %v74 = vld [vmem:[%s1] sm:$0x1]
  %v76 = vperm.slane %v74, 0
  %v78 = vmul.f32 %v72, %v76
  %v79 = vmul.f32 %v73, %v76
  %v80 = vld [vmem:[%s2] sm:$0x1]
  %v82 = vperm.slane %v80, 0
  %v84 = vadd.f32 %v78, %v82
  %v85 = vadd.f32 %v79, %v82
  %v86 = vpack.c.bf16 %v85, %v84
  %v87 = vld [vmem:[%s3] sm:$0xf]
  %v88 = vld [vmem:[%s3 + $0x4] sm:$0xf]
  %v89 = vld [vmem:[%s3 + $0x8] sm:$0xf]
  %v90 = vld [vmem:[%s3 + $0xc] sm:$0xf]
  %v91 = vld [vmem:[%s3 + $0x10] sm:$0xf]
  %v92 = vld [vmem:[%s3 + $0x14] sm:$0xf]
  %v93 = vld [vmem:[%s3 + $0x18] sm:$0xf]
  %v94 = vld [vmem:[%s3 + $0x1c] sm:$0xf]
  %v95 = vld [vmem:[%s3 + $0x20] sm:$0xf]
  %v96 = vld [vmem:[%s3 + $0x24] sm:$0xf]
  %v97 = vld [vmem:[%s3 + $0x28] sm:$0xf]
  %v98 = vld [vmem:[%s3 + $0x2c] sm:$0xf]
  %v99 = vld [vmem:[%s3 + $0x30] sm:$0xf]
  %v100 = vld [vmem:[%s3 + $0x34] sm:$0xf]
  %v101 = vld [vmem:[%s3 + $0x38] sm:$0xf]
  %v102 = vld [vmem:[%s3 + $0x3c] sm:$0xf]
  %v103 = vld [vmem:[%s4] sm:$0x1]
  %v105 = vperm.slane %v103, 0
  %v123 = vunpack.c.l.b16 %v87
  %v124 = vunpack.c.l.b16 %v88
  %v125 = vunpack.c.l.b16 %v89
  %v126 = vunpack.c.l.b16 %v90
  %v127 = vunpack.c.l.b16 %v91
  %v128 = vunpack.c.l.b16 %v92
  %v129 = vunpack.c.l.b16 %v93
  %v130 = vunpack.c.l.b16 %v94
  %v131 = vunpack.c.l.b16 %v95
  %v132 = vunpack.c.l.b16 %v96
  %v133 = vunpack.c.l.b16 %v97
  %v134 = vunpack.c.l.b16 %v98
  %v135 = vunpack.c.l.b16 %v99
  %v136 = vunpack.c.l.b16 %v100
  %v137 = vunpack.c.l.b16 %v101
  %v138 = vunpack.c.l.b16 %v102
  %v139 = vpack.c.b16 %v124, %v123
  %v140 = vpack.c.b16 %v126, %v125
  %v141 = vpack.c.b16 %v128, %v127
  %v142 = vpack.c.b16 %v130, %v129
  %v143 = vpack.c.b16 %v132, %v131
  %v144 = vpack.c.b16 %v134, %v133
  %v145 = vpack.c.b16 %v136, %v135
  %v146 = vpack.c.b16 %v138, %v137
  %155 = vmatpush.bf16.msra.mxu0 %v146
  %156 = vmatpush.bf16.msra.mxu0 %v145
  %157 = vmatpush.bf16.msra.mxu0 %v144
  %158 = vmatpush.bf16.msra.mxu0 %v143
  %159 = vmatpush.bf16.msra.mxu0 %v142
  %160 = vmatpush.bf16.msra.mxu0 %v141
  %161 = vmatpush.bf16.msra.mxu0 %v140
  %162 = vmatpush.bf16.msra.mxu0 %v139
  %163 = vmatmul.bf16.gmra.mxu0 %v86
  %v164 = vpop.f32.mrf.mxu0
  %v165 = vadd.f32 %v105, %v164
  %v166 = vpop.f32.mrf.mxu0
  %v167 = vadd.f32 %v105, %v166
  %168 = vdwg.mxu0
  %v169 = vld [vmem:[%s5] sm:$0xff]
  %v170 = vld [vmem:[%s5 + $0x8] sm:$0xff]
  %v171 = vadd.f32 %v165, %v169
  %v172 = vadd.f32 %v167, %v170
  %173 = vst [vmem:[%s6] sm:$0xff] %v171
  %174 = vst [vmem:[%s6 + $0x8] sm:$0xff] %v172
  // Predicated region
  $region26: #{_lambda_.9} parent=0 // pred_check
    _
  $region27: #{_lambda_.9} parent=0 // pred_check_branch
    %176 = sbr.rel (0) target = $region29
  $region28: #{_lambda_.9} parent=0 // pred_region
    _
  $region29: #{_lambda_.9} parent=0 // pred_fallthru
    _
  // Predicated region
  $region30: #{_lambda_.9} parent=0 // pred_check
    _
  $region31: #{_lambda_.9} parent=0 // pred_check_branch
    %178 = sbr.rel (0) target = $region33
  $region32: #{_lambda_.9} parent=0 // pred_region
    _
  $region33: #{_lambda_.9} parent=0 // pred_fallthru
    _

// kernel: _lambda_.10
$region0: #{_lambda_.10}
  #allocation0 [shape = 'u32[]', space=smem, size = 0x4, offset = 0x4, fixed_abs, tag = 'smem constant byte address 0x4 - core index']
  #allocation1 [shape = 'u32[72,128]{1,0:T(1,128)}', space=vmem, size = 0x9000, scoped, tag = 'internal scratch']
  %s0 = inlined_call_operand.vmem [shape: f32[16,128], index: 0, kind: input, shape index: {}]
  %s1 = inlined_call_operand.vmem [shape: f32[1,128], index: 1, kind: input, shape index: {}]
  %s2 = inlined_call_operand.vmem [shape: f32[1,128], index: 2, kind: input, shape index: {}]
  %s3 = inlined_call_operand.vmem [shape: bf16[128,256], index: 3, kind: input, shape index: {}]
  %s4 = inlined_call_operand.vmem [shape: f32[1,256], index: 4, kind: input, shape index: {}]
  %s5 = inlined_call_operand.vmem [shape: bf16[16,256], index: 5, kind: output, shape index: {}]
  %s6 = sld [smem:[#allocation0]]
  $region30: #{_lambda_.10} parent=0
    _
  %s8 = ssub.s32 1, %s6
  %s9 = scalar_select 0, %s8, %s6
  // Predicated region
  $region2: #{_lambda_.10} parent=0 // pred_check
    _
  $region3: #{_lambda_.10} parent=0 // pred_check_branch
    %11 = sbr.rel (0) target = $region5
  $region4: #{_lambda_.10} parent=0 // pred_region
    _
  $region5: #{_lambda_.10} parent=0 // pred_fallthru
    _
  // Predicated region
  $region6: #{_lambda_.10} parent=0 // pred_check
    _
  $region7: #{_lambda_.10} parent=0 // pred_check_branch
    %13 = sbr.rel (0) target = $region9
  $region8: #{_lambda_.10} parent=0 // pred_region
    _
  $region9: #{_lambda_.10} parent=0 // pred_fallthru
    _
  // Predicated region
  $region10: #{_lambda_.10} parent=0 // pred_check
    _
  $region11: #{_lambda_.10} parent=0 // pred_check_branch
    %15 = sbr.rel (0) target = $region13
  $region12: #{_lambda_.10} parent=0 // pred_region
    _
  $region13: #{_lambda_.10} parent=0 // pred_fallthru
    _
  // Predicated region
  $region14: #{_lambda_.10} parent=0 // pred_check
    _
  $region15: #{_lambda_.10} parent=0 // pred_check_branch
    %17 = sbr.rel (0) target = $region17
  $region16: #{_lambda_.10} parent=0 // pred_region
    _
  $region17: #{_lambda_.10} parent=0 // pred_fallthru
    _
  // Predicated region
  $region18: #{_lambda_.10} parent=0 // pred_check
    _
  $region19: #{_lambda_.10} parent=0 // pred_check_branch
    %19 = sbr.rel (0) target = $region21
  $region20: #{_lambda_.10} parent=0 // pred_region
    _
  $region21: #{_lambda_.10} parent=0 // pred_fallthru
    _
  %v20 = vld [vmem:[%s0] sm:$0xff]
  %v21 = vld [vmem:[%s0 + $0x8] sm:$0xff]
  %22 = vadd.xlane.f32.xlu0 %v20
  %v23 = vpop.xlane.xlu0 %22
  %24 = vadd.xlane.f32.xlu0 %v21
  %v25 = vpop.xlane.xlu0 %24
  %v26 = vrcp.pop 128.0
  %v27 = vmul.f32 128.0, %v26
  %v28 = vsub.f32 1.0, %v27
  %v29 = vmul.f32 %v26, %v28
  %v30 = vadd.f32 %v26, %v29
  %vm31 = vweird.f32 %v26
  %v32 = vsel %vm31, %v26, %v30
  %v33 = vmul.f32 %v23, %v32
  %v34 = vmul.f32 %v25, %v32
  %v35 = vsub.f32 %v20, %v33
  %v36 = vsub.f32 %v21, %v34
  %v37 = vmul.f32 %v35, %v35
  %v38 = vmul.f32 %v36, %v36
  %39 = vadd.xlane.f32.xlu0 %v37
  %v40 = vpop.xlane.xlu0 %39
  %41 = vadd.xlane.f32.xlu0 %v38
  %v42 = vpop.xlane.xlu0 %41
  %v43 = vmul.f32 %v40, %v32
  %v44 = vmul.f32 %v42, %v32
  %v45 = vadd.f32 %v43, 1e-05
  %v46 = vadd.f32 %v44, 1e-05
  %v47 = vrsqrt.pop %v45
  %v48 = vmul.f32 %v47, %v45
  %v49 = vmul.f32 %v48, %v47
  %v50 = vmul.f32 0.5, %v49
  %v51 = vsub.f32 1.5, %v50
  %v52 = vmul.f32 %v47, %v51
  %vm53 = vweird.f32 %v45
  %vm54 = vweird.f32 %v47
  %vm55 = vmor %vm53, %vm54
  %v56 = vsel %vm55, %v47, %v52
  %v57 = vrsqrt.pop %v46
  %v58 = vmul.f32 %v57, %v46
  %v59 = vmul.f32 %v58, %v57
  %v60 = vmul.f32 0.5, %v59
  %v61 = vsub.f32 1.5, %v60
  %v62 = vmul.f32 %v57, %v61
  %vm63 = vweird.f32 %v46
  %vm64 = vweird.f32 %v57
  %vm65 = vmor %vm63, %vm64
  %v66 = vsel %vm65, %v57, %v62
  %v67 = vmul.f32 %v35, %v56
  %v68 = vmul.f32 %v36, %v66
  %v69 = vld [vmem:[%s1] sm:$0x1]
  %v71 = vperm.slane %v69, 0
  %v73 = vmul.f32 %v67, %v71
  %v74 = vmul.f32 %v68, %v71
  %v75 = vld [vmem:[%s2] sm:$0x1]
  %v77 = vperm.slane %v75, 0
  %v79 = vadd.f32 %v73, %v77
  %v80 = vadd.f32 %v74, %v77
  %v81 = vpack.c.bf16 %v80, %v79
  %v82 = vld [vmem:[%s3] sm:$0xff]
  %v83 = vld [vmem:[%s3 + $0x8] sm:$0xff]
  %v84 = vld [vmem:[%s3 + $0x10] sm:$0xff]
  %v85 = vld [vmem:[%s3 + $0x18] sm:$0xff]
  %v86 = vld [vmem:[%s3 + $0x20] sm:$0xff]
  %v87 = vld [vmem:[%s3 + $0x28] sm:$0xff]
  %v88 = vld [vmem:[%s3 + $0x30] sm:$0xff]
  %v89 = vld [vmem:[%s3 + $0x38] sm:$0xff]
  %v90 = vld [vmem:[%s3 + $0x40] sm:$0xff]
  %v91 = vld [vmem:[%s3 + $0x48] sm:$0xff]
  %v92 = vld [vmem:[%s3 + $0x50] sm:$0xff]
  %v93 = vld [vmem:[%s3 + $0x58] sm:$0xff]
  %v94 = vld [vmem:[%s3 + $0x60] sm:$0xff]
  %v95 = vld [vmem:[%s3 + $0x68] sm:$0xff]
  %v96 = vld [vmem:[%s3 + $0x70] sm:$0xff]
  %v97 = vld [vmem:[%s3 + $0x78] sm:$0xff]
  %v98 = vld [vmem:[%s4] sm:$0x3]
  %v100 = vperm.slane %v98, 0
  %v101 = vperm.slane %v98, 1
  %v120 = vunpack.c.l.b16 %v82
  %v121 = vunpack.c.h.b16 %v82
  %v122 = vunpack.c.l.b16 %v83
  %v123 = vunpack.c.h.b16 %v83
  %v124 = vunpack.c.l.b16 %v84
  %v125 = vunpack.c.h.b16 %v84
  %v126 = vunpack.c.l.b16 %v85
  %v127 = vunpack.c.h.b16 %v85
  %v128 = vunpack.c.l.b16 %v86
  %v129 = vunpack.c.h.b16 %v86
  %v130 = vunpack.c.l.b16 %v87
  %v131 = vunpack.c.h.b16 %v87
  %v132 = vunpack.c.l.b16 %v88
  %v133 = vunpack.c.h.b16 %v88
  %v134 = vunpack.c.l.b16 %v89
  %v135 = vunpack.c.h.b16 %v89
  %v136 = vunpack.c.l.b16 %v90
  %v137 = vunpack.c.h.b16 %v90
  %v138 = vunpack.c.l.b16 %v91
  %v139 = vunpack.c.h.b16 %v91
  %v140 = vunpack.c.l.b16 %v92
  %v141 = vunpack.c.h.b16 %v92
  %v142 = vunpack.c.l.b16 %v93
  %v143 = vunpack.c.h.b16 %v93
  %v144 = vunpack.c.l.b16 %v94
  %v145 = vunpack.c.h.b16 %v94
  %v146 = vunpack.c.l.b16 %v95
  %v147 = vunpack.c.h.b16 %v95
  %v148 = vunpack.c.l.b16 %v96
  %v149 = vunpack.c.h.b16 %v96
  %v150 = vunpack.c.l.b16 %v97
  %v151 = vunpack.c.h.b16 %v97
  %v152 = vpack.c.b16 %v122, %v120
  %v153 = vpack.c.b16 %v123, %v121
  %v154 = vpack.c.b16 %v126, %v124
  %v155 = vpack.c.b16 %v127, %v125
  %v156 = vpack.c.b16 %v130, %v128
  %v157 = vpack.c.b16 %v131, %v129
  %v158 = vpack.c.b16 %v134, %v132
  %v159 = vpack.c.b16 %v135, %v133
  %v160 = vpack.c.b16 %v138, %v136
  %v161 = vpack.c.b16 %v139, %v137
  %v162 = vpack.c.b16 %v142, %v140
  %v163 = vpack.c.b16 %v143, %v141
  %v164 = vpack.c.b16 %v146, %v144
  %v165 = vpack.c.b16 %v147, %v145
  %v166 = vpack.c.b16 %v150, %v148
  %v167 = vpack.c.b16 %v151, %v149
  %184 = vmatpush.bf16.msra.mxu0 %v166
  %185 = vmatpush.bf16.msra.mxu0 %v164
  %186 = vmatpush.bf16.msra.mxu0 %v162
  %187 = vmatpush.bf16.msra.mxu0 %v160
  %188 = vmatpush.bf16.msra.mxu0 %v158
  %189 = vmatpush.bf16.msra.mxu0 %v156
  %190 = vmatpush.bf16.msra.mxu0 %v154
  %191 = vmatpush.bf16.msra.mxu0 %v152
  %192 = vmatmul.bf16.gmra.mxu0 %v81
  %v193 = vpop.f32.mrf.mxu0
  %v194 = vadd.f32 %v100, %v193
  %v195 = vpop.f32.mrf.mxu0
  %v196 = vadd.f32 %v100, %v195
  %197 = vdwg.mxu0
  %198 = vmatpush.bf16.msra.mxu0 %v167
  %199 = vmatpush.bf16.msra.mxu0 %v165
  %200 = vmatpush.bf16.msra.mxu0 %v163
  %201 = vmatpush.bf16.msra.mxu0 %v161
  %202 = vmatpush.bf16.msra.mxu0 %v159
  %203 = vmatpush.bf16.msra.mxu0 %v157
  %204 = vmatpush.bf16.msra.mxu0 %v155
  %205 = vmatpush.bf16.msra.mxu0 %v153
  %206 = vmatmul.bf16.gmra.mxu0 %v81
  %v207 = vpop.f32.mrf.mxu0
  %v208 = vadd.f32 %v101, %v207
  %v209 = vpop.f32.mrf.mxu0
  %v210 = vadd.f32 %v101, %v209
  %211 = vdwg.mxu0
  %v212 = vmax.f32 %v194, 0.0
  %v213 = vmax.f32 %v208, 0.0
  %v214 = vmax.f32 %v196, 0.0
  %v215 = vmax.f32 %v210, 0.0
  %v216 = vpack.c.bf16 %v213, %v212
  %v217 = vpack.c.bf16 %v215, %v214
  %218 = vst [vmem:[%s5] sm:$0xff] %v216
  %219 = vst [vmem:[%s5 + $0x8] sm:$0xff] %v217
  // Predicated region
  $region22: #{_lambda_.10} parent=0 // pred_check
    _
  $region23: #{_lambda_.10} parent=0 // pred_check_branch
    %221 = sbr.rel (0) target = $region25
  $region24: #{_lambda_.10} parent=0 // pred_region
    _
  $region25: #{_lambda_.10} parent=0 // pred_fallthru
    _
  // Predicated region
  $region26: #{_lambda_.10} parent=0 // pred_check
    _
  $region27: #{_lambda_.10} parent=0 // pred_check_branch
    %223 = sbr.rel (0) target = $region29
  $region28: #{_lambda_.10} parent=0 // pred_region
    _
  $region29: #{_lambda_.10} parent=0 // pred_fallthru
    _

// kernel: _lambda_.11
$region0: #{_lambda_.11}
  #allocation0 [shape = 'u32[]', space=smem, size = 0x4, offset = 0x4, fixed_abs, tag = 'smem constant byte address 0x4 - core index']
  #allocation1 [shape = 'u32[72,128]{1,0:T(1,128)}', space=vmem, size = 0x9000, scoped, tag = 'internal scratch']
  %s0 = inlined_call_operand.vmem [shape: bf16[16,256], index: 0, kind: input, shape index: {}]
  %s1 = inlined_call_operand.vmem [shape: f32[1,256], index: 1, kind: input, shape index: {}]
  %s2 = inlined_call_operand.vmem [shape: f32[1,256], index: 2, kind: input, shape index: {}]
  %s3 = inlined_call_operand.vmem [shape: bf16[256,128], index: 3, kind: input, shape index: {}]
  %s4 = inlined_call_operand.vmem [shape: f32[1,128], index: 4, kind: input, shape index: {}]
  %s5 = inlined_call_operand.vmem [shape: f32[16,128], index: 5, kind: input, shape index: {}]
  %s6 = inlined_call_operand.hbm [shape: f32[16,128], index: 6, kind: output, shape index: {}]
  %s7 = sld [smem:[#allocation0]]
  $region34: #{_lambda_.11} parent=0
    _
  %s9 = ssub.s32 1, %s7
  %s10 = scalar_select 0, %s9, %s7
  $region1: #{_lambda_.11} parent=0
    #allocation2 [shape = 'u8[8192]{0}', space=vmem, size = 0x2000, scoped, tag = 'output window, operand 0, single buffered']
    #allocation3 [shape = 's32[1]{0}', space=sflag, size = 0x4, scoped, tag = 'scoped memory for _lambda_.11']
    %11 = vsyncpa [#allocation3], 0
    // Predicated region
    $region2: #{_lambda_.11} parent=1 // pred_check
      _
    $region3: #{_lambda_.11} parent=1 // pred_check_branch
      %13 = sbr.rel (0) target = $region5
    $region4: #{_lambda_.11} parent=1 // pred_region
      _
    $region5: #{_lambda_.11} parent=1 // pred_fallthru
      _
    // Predicated region
    $region6: #{_lambda_.11} parent=1 // pred_check
      _
    $region7: #{_lambda_.11} parent=1 // pred_check_branch
      %15 = sbr.rel (0) target = $region9
    $region8: #{_lambda_.11} parent=1 // pred_region
      _
    $region9: #{_lambda_.11} parent=1 // pred_fallthru
      _
    // Predicated region
    $region10: #{_lambda_.11} parent=1 // pred_check
      _
    $region11: #{_lambda_.11} parent=1 // pred_check_branch
      %17 = sbr.rel (0) target = $region13
    $region12: #{_lambda_.11} parent=1 // pred_region
      _
    $region13: #{_lambda_.11} parent=1 // pred_fallthru
      _
    // Predicated region
    $region14: #{_lambda_.11} parent=1 // pred_check
      _
    $region15: #{_lambda_.11} parent=1 // pred_check_branch
      %19 = sbr.rel (0) target = $region17
    $region16: #{_lambda_.11} parent=1 // pred_region
      _
    $region17: #{_lambda_.11} parent=1 // pred_fallthru
      _
    // Predicated region
    $region18: #{_lambda_.11} parent=1 // pred_check
      _
    $region19: #{_lambda_.11} parent=1 // pred_check_branch
      %21 = sbr.rel (0) target = $region21
    $region20: #{_lambda_.11} parent=1 // pred_region
      _
    $region21: #{_lambda_.11} parent=1 // pred_fallthru
      _
    // Predicated region
    $region22: #{_lambda_.11} parent=1 // pred_check
      _
    $region23: #{_lambda_.11} parent=1 // pred_check_branch
      %23 = sbr.rel (0) target = $region25
    $region24: #{_lambda_.11} parent=1 // pred_region
      _
    $region25: #{_lambda_.11} parent=1 // pred_fallthru
      _
    %v24 = vld [vmem:[%s0] sm:$0xff]
    %v25 = vld [vmem:[%s0 + $0x8] sm:$0xff]
    %v26 = vunpack.c.l.bf16 %v24
    %v27 = vunpack.c.h.bf16 %v24
    %v28 = vunpack.c.l.bf16 %v25
    %v29 = vunpack.c.h.bf16 %v25
    %v30 = vadd.f32 %v26, %v27
    %31 = vadd.xlane.f32.xlu0 %v30
    %v32 = vpop.xlane.xlu0 %31
    %v33 = vadd.f32 %v28, %v29
    %34 = vadd.xlane.f32.xlu0 %v33
    %v35 = vpop.xlane.xlu0 %34
    %v36 = vrcp.pop 256.0
    %v37 = vmul.f32 256.0, %v36
    %v38 = vsub.f32 1.0, %v37
    %v39 = vmul.f32 %v36, %v38
    %v40 = vadd.f32 %v36, %v39
    %vm41 = vweird.f32 %v36
    %v42 = vsel %vm41, %v36, %v40
    %v43 = vmul.f32 %v32, %v42
    %v44 = vmul.f32 %v35, %v42
    %v45 = vsub.f32 %v26, %v43
    %v46 = vsub.f32 %v27, %v43
    %v47 = vsub.f32 %v28, %v44
    %v48 = vsub.f32 %v29, %v44
    %v49 = vmul.f32 %v45, %v45
    %v50 = vmul.f32 %v46, %v46
    %v51 = vmul.f32 %v47, %v47
    %v52 = vmul.f32 %v48, %v48
    %v53 = vadd.f32 %v49, %v50
    %54 = vadd.xlane.f32.xlu0 %v53
    %v55 = vpop.xlane.xlu0 %54
    %v56 = vadd.f32 %v51, %v52
    %57 = vadd.xlane.f32.xlu0 %v56
    %v58 = vpop.xlane.xlu0 %57
    %v59 = vmul.f32 %v55, %v42
    %v60 = vmul.f32 %v58, %v42
    %v61 = vadd.f32 %v59, 1e-05
    %v62 = vadd.f32 %v60, 1e-05
    %v63 = vrsqrt.pop %v61
    %v64 = vmul.f32 %v63, %v61
    %v65 = vmul.f32 %v64, %v63
    %v66 = vmul.f32 0.5, %v65
    %v67 = vsub.f32 1.5, %v66
    %v68 = vmul.f32 %v63, %v67
    %vm69 = vweird.f32 %v61
    %vm70 = vweird.f32 %v63
    %vm71 = vmor %vm69, %vm70
    %v72 = vsel %vm71, %v63, %v68
    %v73 = vrsqrt.pop %v62
    %v74 = vmul.f32 %v73, %v62
    %v75 = vmul.f32 %v74, %v73
    %v76 = vmul.f32 0.5, %v75
    %v77 = vsub.f32 1.5, %v76
    %v78 = vmul.f32 %v73, %v77
    %vm79 = vweird.f32 %v62
    %vm80 = vweird.f32 %v73
    %vm81 = vmor %vm79, %vm80
    %v82 = vsel %vm81, %v73, %v78
    %v83 = vmul.f32 %v45, %v72
    %v84 = vmul.f32 %v46, %v72
    %v85 = vmul.f32 %v47, %v82
    %v86 = vmul.f32 %v48, %v82
    %v87 = vld [vmem:[%s1] sm:$0x3]
    %v89 = vperm.slane %v87, 0
    %v90 = vperm.slane %v87, 1
    %v93 = vmul.f32 %v83, %v89
    %v94 = vmul.f32 %v84, %v90
    %v95 = vmul.f32 %v85, %v89
    %v96 = vmul.f32 %v86, %v90
    %v97 = vld [vmem:[%s2] sm:$0x3]
    %v99 = vperm.slane %v97, 0
    %v100 = vperm.slane %v97, 1
    %v103 = vadd.f32 %v93, %v99
    %v104 = vadd.f32 %v94, %v100
    %v105 = vadd.f32 %v95, %v99
    %v106 = vadd.f32 %v96, %v100
    %v107 = vpack.c.bf16 %v105, %v103
    %v108 = vpack.c.bf16 %v106, %v104
    %v109 = vld [vmem:[%s3] sm:$0xf]
    %v110 = vld [vmem:[%s3 + $0x4] sm:$0xf]
    %v111 = vld [vmem:[%s3 + $0x8] sm:$0xf]
    %v112 = vld [vmem:[%s3 + $0xc] sm:$0xf]
    %v113 = vld [vmem:[%s3 + $0x10] sm:$0xf]
    %v114 = vld [vmem:[%s3 + $0x14] sm:$0xf]
    %v115 = vld [vmem:[%s3 + $0x18] sm:$0xf]
    %v116 = vld [vmem:[%s3 + $0x1c] sm:$0xf]
    %v117 = vld [vmem:[%s3 + $0x20] sm:$0xf]
    %v118 = vld [vmem:[%s3 + $0x24] sm:$0xf]
    %v119 = vld [vmem:[%s3 + $0x28] sm:$0xf]
    %v120 = vld [vmem:[%s3 + $0x2c] sm:$0xf]
    %v121 = vld [vmem:[%s3 + $0x30] sm:$0xf]
    %v122 = vld [vmem:[%s3 + $0x34] sm:$0xf]
    %v123 = vld [vmem:[%s3 + $0x38] sm:$0xf]
    %v124 = vld [vmem:[%s3 + $0x3c] sm:$0xf]
    %v125 = vld [vmem:[%s3 + $0x40] sm:$0xf]
    %v126 = vld [vmem:[%s3 + $0x44] sm:$0xf]
    %v127 = vld [vmem:[%s3 + $0x48] sm:$0xf]
    %v128 = vld [vmem:[%s3 + $0x4c] sm:$0xf]
    %v129 = vld [vmem:[%s3 + $0x50] sm:$0xf]
    %v130 = vld [vmem:[%s3 + $0x54] sm:$0xf]
    %v131 = vld [vmem:[%s3 + $0x58] sm:$0xf]
    %v132 = vld [vmem:[%s3 + $0x5c] sm:$0xf]
    %v133 = vld [vmem:[%s3 + $0x60] sm:$0xf]
    %v134 = vld [vmem:[%s3 + $0x64] sm:$0xf]
    %v135 = vld [vmem:[%s3 + $0x68] sm:$0xf]
    %v136 = vld [vmem:[%s3 + $0x6c] sm:$0xf]
    %v137 = vld [vmem:[%s3 + $0x70] sm:$0xf]
    %v138 = vld [vmem:[%s3 + $0x74] sm:$0xf]
    %v139 = vld [vmem:[%s3 + $0x78] sm:$0xf]
    %v140 = vld [vmem:[%s3 + $0x7c] sm:$0xf]
    %v141 = vld [vmem:[%s4] sm:$0x1]
    %v143 = vperm.slane %v141, 0
    %v177 = vunpack.c.l.b16 %v109
    %v178 = vunpack.c.l.b16 %v110
    %v179 = vunpack.c.l.b16 %v111
    %v180 = vunpack.c.l.b16 %v112
    %v181 = vunpack.c.l.b16 %v113
    %v182 = vunpack.c.l.b16 %v114
    %v183 = vunpack.c.l.b16 %v115
    %v184 = vunpack.c.l.b16 %v116
    %v185 = vunpack.c.l.b16 %v117
    %v186 = vunpack.c.l.b16 %v118
    %v187 = vunpack.c.l.b16 %v119
    %v188 = vunpack.c.l.b16 %v120
    %v189 = vunpack.c.l.b16 %v121
    %v190 = vunpack.c.l.b16 %v122
    %v191 = vunpack.c.l.b16 %v123
    %v192 = vunpack.c.l.b16 %v124
    %v193 = vunpack.c.l.b16 %v125
    %v194 = vunpack.c.l.b16 %v126
    %v195 = vunpack.c.l.b16 %v127
    %v196 = vunpack.c.l.b16 %v128
    %v197 = vunpack.c.l.b16 %v129
    %v198 = vunpack.c.l.b16 %v130
    %v199 = vunpack.c.l.b16 %v131
    %v200 = vunpack.c.l.b16 %v132
    %v201 = vunpack.c.l.b16 %v133
    %v202 = vunpack.c.l.b16 %v134
    %v203 = vunpack.c.l.b16 %v135
    %v204 = vunpack.c.l.b16 %v136
    %v205 = vunpack.c.l.b16 %v137
    %v206 = vunpack.c.l.b16 %v138
    %v207 = vunpack.c.l.b16 %v139
    %v208 = vunpack.c.l.b16 %v140
    %v209 = vpack.c.b16 %v178, %v177
    %v210 = vpack.c.b16 %v180, %v179
    %v211 = vpack.c.b16 %v182, %v181
    %v212 = vpack.c.b16 %v184, %v183
    %v213 = vpack.c.b16 %v186, %v185
    %v214 = vpack.c.b16 %v188, %v187
    %v215 = vpack.c.b16 %v190, %v189
    %v216 = vpack.c.b16 %v192, %v191
    %v217 = vpack.c.b16 %v194, %v193
    %v218 = vpack.c.b16 %v196, %v195
    %v219 = vpack.c.b16 %v198, %v197
    %v220 = vpack.c.b16 %v200, %v199
    %v221 = vpack.c.b16 %v202, %v201
    %v222 = vpack.c.b16 %v204, %v203
    %v223 = vpack.c.b16 %v206, %v205
    %v224 = vpack.c.b16 %v208, %v207
    %241 = vmatpush.bf16.msra.mxu0 %v216
    %242 = vmatpush.bf16.msra.mxu0 %v215
    %243 = vmatpush.bf16.msra.mxu0 %v214
    %244 = vmatpush.bf16.msra.mxu0 %v213
    %245 = vmatpush.bf16.msra.mxu0 %v212
    %246 = vmatpush.bf16.msra.mxu0 %v211
    %247 = vmatpush.bf16.msra.mxu0 %v210
    %248 = vmatpush.bf16.msra.mxu0 %v209
    %249 = vmatmul.bf16.gmra.mxu0 %v107
    %v250 = vpop.f32.mrf.mxu0
    %v251 = vadd.f32 %v143, %v250
    %v252 = vpop.f32.mrf.mxu0
    %v253 = vadd.f32 %v143, %v252
    %254 = vdwg.mxu0
    %255 = vmatpush.bf16.msra.mxu0 %v224
    %256 = vmatpush.bf16.msra.mxu0 %v223
    %257 = vmatpush.bf16.msra.mxu0 %v222
    %258 = vmatpush.bf16.msra.mxu0 %v221
    %259 = vmatpush.bf16.msra.mxu0 %v220
    %260 = vmatpush.bf16.msra.mxu0 %v219
    %261 = vmatpush.bf16.msra.mxu0 %v218
    %262 = vmatpush.bf16.msra.mxu0 %v217
    %263 = vmatmul.bf16.gmra.mxu0 %v108
    %v264 = vpop.f32.mrf.mxu0
    %v265 = vadd.f32 %v251, %v264
    %v266 = vpop.f32.mrf.mxu0
    %v267 = vadd.f32 %v253, %v266
    %268 = vdwg.mxu0
    %v269 = vld [vmem:[%s5] sm:$0xff]
    %v270 = vld [vmem:[%s5 + $0x8] sm:$0xff]
    %v271 = vadd.f32 %v265, %v269
    %v272 = vadd.f32 %v267, %v270
    %273 = vst [vmem:[#allocation2] sm:$0xff] %v271
    %274 = vst [vmem:[#allocation2 + $0x8] sm:$0xff] %v272
    // Predicated region
    $region26: #{_lambda_.11} parent=1 // pred_check
      _
    $region27: #{_lambda_.11} parent=1 // pred_check_branch
      %276 = sbr.rel (0) target = $region29
    $region28: #{_lambda_.11} parent=1 // pred_region
      %278 = vsyncadd [#allocation3], 0
      %s279 = sshll.u32 [#allocation2], 4
      %s280 = int_to_ptr.vmem [resolvable:$true] %s279
      %s281 = sshll.u32 %s6, 4
      %s282 = int_to_ptr.hbm [resolvable:$true] %s281
      %287 = dma.vmem_to_hbm [thread:$0]  %s280, 256, %s282, [#allocation3], 128, 128, 8
    $region29: #{_lambda_.11} parent=1 // pred_fallthru
      _
    // Predicated region
    $region30: #{_lambda_.11} parent=1 // pred_check
      _
    $region31: #{_lambda_.11} parent=1 // pred_check_branch
      %289 = sbr.rel (0) target = $region33
    $region32: #{_lambda_.11} parent=1 // pred_region
      %291 = dma.done [#allocation3], 256
    $region33: #{_lambda_.11} parent=1 // pred_fallthru
      _
    %292 = vsyncpa [#allocation3], 1

</llo_original>
